<compile_context>
chip_gen: v5e
topology: v5e:2x2
jax: 0.10.0
libtpu: 0.0.40
codegen_flags: <defaults>
</compile_context>

<pallas_src>
import jax
import jax.numpy as jnp
from jax.experimental import pallas as pl
from jax.experimental.pallas import tpu as pltpu


def _fused_linear_kernel(x_ref, w_ref, b_ref, o_ref):
    # Single MXU matmul with f32 accumulation, then VPU bias add.
    y = jnp.dot(x_ref[...], w_ref[...], preferred_element_type=jnp.float32)
    y = y + b_ref[...]                       # (1, N) broadcast, f32
    o_ref[...] = y.astype(o_ref.dtype)


def fuse_params(w0, b0, w1, b1):
    """Fold the two Linears into one. Weights stored as [in, out]."""
    w_fused = w0 @ w1                        # [768, 256]
    b_fused = b0 @ w1 + b1                   # [256]
    return w_fused, b_fused


def fused_linear(x, w_fused, b_fused, *, tm=None, compute_dtype=jnp.float32):
    """x: [B, S, K]; w_fused: [K, N]; b_fused: [N]. Returns [B, S, N] (x.dtype)."""
    B, S, K = x.shape
    N = w_fused.shape[1]
    M = B * S
    if tm is None:
        tm = M
    assert M % tm == 0, "tile over rows must divide B*S"
    assert tm % 8 == 0, "row tile must be a multiple of 8 (sublanes)"

    x2d = x.reshape(M, K).astype(compute_dtype)
    w = w_fused.astype(compute_dtype)
    b2d = b_fused.reshape(1, N).astype(jnp.float32)

    out = pl.pallas_call(
        _fused_linear_kernel,
        out_shape=jax.ShapeDtypeStruct((M, N), x.dtype),
        grid_spec=pl.GridSpec(
            grid=(M // tm,),
            in_specs=[
                pl.BlockSpec((tm, K), lambda i: (i, 0)),   # x tile
                pl.BlockSpec((K, N), lambda i: (0, 0)),    # fused W (resident)
                pl.BlockSpec((1, N), lambda i: (0, 0)),    # fused bias
            ],
            out_specs=pl.BlockSpec((tm, N), lambda i: (i, 0)),
        ),
        compiler_params=pltpu.CompilerParams(
            dimension_semantics=("parallel",)),
    )(x2d, w, b2d)

    return out.reshape(B, S, N)


def _pick_config(M):
    """Per-generation tiling / dtype choice (v7x: 2 TCs, bf16; v6e: bf16; v5e: f32)."""
    kind = ""
    try:
        kind = jax.devices()[0].device_kind.lower()
    except Exception:
        pass
    is_v7 = "v7" in kind
    use_bf16 = ("v6" in kind) or is_v7
    if is_v7 and (M % 2 == 0) and ((M // 2) % 8 == 0):
        tm = M // 2           # one even tile per TensorCore
    else:
        tm = M                # single grid step on single-TC chips
    compute_dtype = jnp.bfloat16 if use_bf16 else jnp.float32
    return tm, compute_dtype


def init_params(key):
    """Deterministic init mimicking torch.nn.Linear (uniform +-1/sqrt(fan_in)).
    Weights stored already transposed to [in_features, out_features]."""
    k0, k1, k2, k3 = jax.random.split(key, 4)
    bound0 = 1.0 / jnp.sqrt(768.0)
    bound1 = 1.0 / jnp.sqrt(256.0)
    w0 = jax.random.uniform(k0, (768, 256), jnp.float32, -bound0, bound0)
    b0 = jax.random.uniform(k1, (256,), jnp.float32, -bound0, bound0)
    w1 = jax.random.uniform(k2, (256, 256), jnp.float32, -bound1, bound1)
    b1 = jax.random.uniform(k3, (256,), jnp.float32, -bound1, bound1)
    return w0, b0, w1, b1


if __name__ == "__main__":
    key = jax.random.PRNGKey(0)
    kx, kp = jax.random.split(key)

    # Input matches the module: [1, 384, 768]
    x = jax.random.normal(kx, (1, 384, 768), jnp.float32)
    w0, b0, w1, b1 = init_params(kp)

    # One-time weight fusion (weights are constants of the module).
    w_fused, b_fused = fuse_params(w0, b0, w1, b1)

    tm, compute_dtype = _pick_config(x.shape[0] * x.shape[1])
    y = fused_linear(x, w_fused, b_fused, tm=tm, compute_dtype=compute_dtype)
    y = jax.block_until_ready(y)

    # Reference: exact two-Linear forward in fp32 (unfused).
    ref = (x.reshape(384, 768) @ w0 + b0) @ w1 + b1
    ref = ref.reshape(1, 384, 256)
    assert y.shape == (1, 384, 256), y.shape

    # bf16 weights/activations change rounding; loosen tolerance accordingly.
    tol = 5e-2 if compute_dtype == jnp.bfloat16 else 1e-3
    assert jnp.allclose(y, ref, atol=tol, rtol=tol), "mismatch vs reference"

    print("KERNEL_OK")
</pallas_src>

<mosaic_0001>
module attributes {stable_mosaic.version = 11 : i64} {
  func.func @_fused_linear_kernel(%arg0: i32, %arg1: memref<384x768xf32, #tpu.memory_space<vmem>>, %arg2: memref<768x256xf32, #tpu.memory_space<vmem>>, %arg3: memref<1x256xf32, #tpu.memory_space<vmem>>, %arg4: memref<384x256xf32, #tpu.memory_space<vmem>>) attributes {dimension_semantics = [#tpu.dimension_semantics<parallel>], iteration_bounds = array<i64: 1>, scalar_prefetch = 0 : i64, scratch_operands = 0 : i64, tpu.core_type = #tpu.core_type<tc>, window_params = [{transform_indices = @transform_0, window_bounds = array<i64: 384, 768>}, {pipeline_mode = #tpu.pipeline_mode<synchronous>, transform_indices = @transform_1, window_bounds = array<i64: 768, 256>}, {pipeline_mode = #tpu.pipeline_mode<synchronous>, transform_indices = @transform_2, window_bounds = array<i64: 1, 256>}, {transform_indices = @transform_3, window_bounds = array<i64: 384, 256>}]} {
    %c0 = arith.constant 0 : index
    %c0_0 = arith.constant 0 : index
    %0 = vector.load %arg1[%c0, %c0_0] : memref<384x768xf32, #tpu.memory_space<vmem>>, vector<384x768xf32>
    %c0_1 = arith.constant 0 : index
    %c0_2 = arith.constant 0 : index
    %1 = vector.load %arg2[%c0_1, %c0_2] : memref<768x256xf32, #tpu.memory_space<vmem>>, vector<768x256xf32>
    %cst = arith.constant dense<0.000000e+00> : vector<384x256xf32>
    %2 = tpu.matmul %0, %1, %cst {dimension_numbers = #tpu.dot_dimension_numbers<[1], [0], [0], [1], [0, 0, 1, 1], [], []>} : vector<384x768xf32>, vector<768x256xf32>, vector<384x256xf32> -> vector<384x256xf32>
    %c0_3 = arith.constant 0 : index
    %c0_4 = arith.constant 0 : index
    %3 = vector.load %arg3[%c0_3, %c0_4] : memref<1x256xf32, #tpu.memory_space<vmem>>, vector<1x256xf32>
    %4 = vector.broadcast %3 : vector<1x256xf32> to vector<384x256xf32>
    %5 = arith.addf %2, %4 : vector<384x256xf32>
    %c0_5 = arith.constant 0 : index
    %c0_6 = arith.constant 0 : index
    %6 = vector.load %arg4[%c0_5, %c0_6] : memref<384x256xf32, #tpu.memory_space<vmem>>, vector<384x256xf32>
    tpu.vector_store %arg4[%c0_5, %c0_6], %5 {strides = array<i32>} : memref<384x256xf32, #tpu.memory_space<vmem>>, vector<384x256xf32>,
    return
  }
  func.func @transform_0(%arg0: i32) -> (i32, i32) {
    %c0_i32 = arith.constant 0 : i32
    %c0_i32_0 = arith.constant 0 : i32
    return %arg0, %c0_i32 : i32, i32
  }
  func.func @transform_1(%arg0: i32) -> (i32, i32) {
    %c0_i32 = arith.constant 0 : i32
    %c0_i32_0 = arith.constant 0 : i32
    %c0_i32_1 = arith.constant 0 : i32
    return %c0_i32, %c0_i32_0 : i32, i32
  }
  func.func @transform_2(%arg0: i32) -> (i32, i32) {
    %c0_i32 = arith.constant 0 : i32
    %c0_i32_0 = arith.constant 0 : i32
    %c0_i32_1 = arith.constant 0 : i32
    return %c0_i32, %c0_i32_0 : i32, i32
  }
  func.func @transform_3(%arg0: i32) -> (i32, i32) {
    %c0_i32 = arith.constant 0 : i32
    %c0_i32_0 = arith.constant 0 : i32
    return %arg0, %c0_i32 : i32, i32
  }
}

</mosaic_0001>

<llo_original>
// kernel: tpu_custom_call.1
$region0: #{tpu_custom_call.1}
  #allocation0 [shape = 'u32[]', space=smem, size = 0x4, offset = 0x4, fixed_abs, tag = 'smem constant byte address 0x4 - core index']
  #allocation1 [shape = 'u32[72,128]{1,0:T(1,128)}', space=vmem, size = 0x9000, scoped, tag = 'internal scratch']
  %s0 = inlined_call_operand.hbm [shape: f32[384,768], index: 0, kind: input, shape index: {}]
  %s1 = inlined_call_operand.hbm [shape: f32[768,256], index: 1, kind: input, shape index: {}]
  %s2 = inlined_call_operand.hbm [shape: f32[1,256], index: 2, kind: input, shape index: {}]
  %s3 = inlined_call_operand.hbm [shape: f32[384,256], index: 3, kind: output, shape index: {}]
  %s4 = sld [smem:[#allocation0]]
  $region34: #{tpu_custom_call.1} parent=0
    _
  %s6 = ssub.s32 1, %s4
  %s7 = scalar_select 0, %s6, %s4
  $region1: #{tpu_custom_call.1} parent=0
    #allocation2 [shape = 'u8[1179648]{0}', space=vmem, size = 0x120000, scoped, tag = 'input window, operand 0, single buffered']
    #allocation3 [shape = 's32[1]{0}', space=sflag, size = 0x4, scoped, tag = 'scoped memory for tpu_custom_call.1']
    #allocation4 [shape = 's32[1]{0}', space=sflag, size = 0x4, scoped, tag = 'scoped memory for tpu_custom_call.1']
    #allocation5 [shape = 'u8[786432]{0}', space=vmem, size = 0xc0000, scoped, tag = 'input window, operand 1, single buffered']
    #allocation6 [shape = 's32[1]{0}', space=sflag, size = 0x4, scoped, tag = 'scoped memory for tpu_custom_call.1']
    #allocation7 [shape = 'u8[1024]{0}', space=vmem, size = 0x400, scoped, tag = 'input window, operand 2, single buffered']
    #allocation8 [shape = 'u8[393216]{0}', space=vmem, size = 0x60000, scoped, tag = 'output window, operand 0, single buffered']
    %8 = vsyncpa [#allocation3], 0
    %9 = vsyncpa [#allocation6], 0
    %10 = vsyncpa [#allocation4], 0
    // Predicated region
    $region2: #{tpu_custom_call.1} parent=1 // pred_check
      _
    $region3: #{tpu_custom_call.1} parent=1 // pred_check_branch
      %12 = sbr.rel (0) target = $region5
    $region4: #{tpu_custom_call.1} parent=1 // pred_region
      %14 = vsyncadd [#allocation3], 0
      %s15 = sshll.u32 %s0, 4
      %s16 = int_to_ptr.hbm [resolvable:$true] %s15
      %s17 = sshll.u32 [#allocation2], 4
      %s18 = int_to_ptr.vmem [resolvable:$true] %s17
      %23 = dma.hbm_to_vmem [thread:$0]  %s16, 36864, %s18, [#allocation3], 768, 768, 48
    $region5: #{tpu_custom_call.1} parent=1 // pred_fallthru
      _
    // Predicated region
    $region6: #{tpu_custom_call.1} parent=1 // pred_check
      _
    $region7: #{tpu_custom_call.1} parent=1 // pred_check_branch
      %25 = sbr.rel (0) target = $region9
    $region8: #{tpu_custom_call.1} parent=1 // pred_region
      %27 = vsyncadd [#allocation6], 0
      %s28 = sshll.u32 %s1, 4
      %s29 = int_to_ptr.hbm [resolvable:$true] %s28
      %s30 = sshll.u32 [#allocation5], 4
      %s31 = int_to_ptr.vmem [resolvable:$true] %s30
      %36 = dma.hbm_to_vmem [thread:$0]  %s29, 24576, %s31, [#allocation6], 256, 256, 16
    $region9: #{tpu_custom_call.1} parent=1 // pred_fallthru
      _
    // Predicated region
    $region10: #{tpu_custom_call.1} parent=1 // pred_check
      _
    $region11: #{tpu_custom_call.1} parent=1 // pred_check_branch
      %38 = sbr.rel (0) target = $region13
    $region12: #{tpu_custom_call.1} parent=1 // pred_region
      %40 = vsyncadd [#allocation6], 0
      %s42 = sshll.u32 %s2, 4
      %s43 = int_to_ptr.hbm [resolvable:$true] %s42
      %s44 = sshll.u32 [#allocation7], 4
      %s45 = int_to_ptr.vmem [resolvable:$true] %s44
      %47 = dma.hbm_to_vmem [thread:$0]  %s43, 32, %s45, [#allocation6]
    $region13: #{tpu_custom_call.1} parent=1 // pred_fallthru
      _
    // Predicated region
    $region14: #{tpu_custom_call.1} parent=1 // pred_check
      _
    $region15: #{tpu_custom_call.1} parent=1 // pred_check_branch
      %49 = sbr.rel (0) target = $region17
    $region16: #{tpu_custom_call.1} parent=1 // pred_region
      %51 = dma.done [#allocation3], 36864
    $region17: #{tpu_custom_call.1} parent=1 // pred_fallthru
      _
    // Predicated region
    $region18: #{tpu_custom_call.1} parent=1 // pred_check
      _
    $region19: #{tpu_custom_call.1} parent=1 // pred_check_branch
      %53 = sbr.rel (0) target = $region21
    $region20: #{tpu_custom_call.1} parent=1 // pred_region
      %55 = dma.done [#allocation6], 24576
    $region21: #{tpu_custom_call.1} parent=1 // pred_fallthru
      _
    // Predicated region
    $region22: #{tpu_custom_call.1} parent=1 // pred_check
      _
    $region23: #{tpu_custom_call.1} parent=1 // pred_check_branch
      %57 = sbr.rel (0) target = $region25
    $region24: #{tpu_custom_call.1} parent=1 // pred_region
      %59 = dma.done [#allocation6], 32
    $region25: #{tpu_custom_call.1} parent=1 // pred_fallthru
      _
    %v60 = vld [vmem:[#allocation2] sm:$0xff]
    %v61 = vld [vmem:[#allocation2 + $0x8] sm:$0xff]
    %v62 = vld [vmem:[#allocation2 + $0x10] sm:$0xff]
    %v63 = vld [vmem:[#allocation2 + $0x18] sm:$0xff]
    %v64 = vld [vmem:[#allocation2 + $0x20] sm:$0xff]
    %v65 = vld [vmem:[#allocation2 + $0x28] sm:$0xff]
    %v66 = vld [vmem:[#allocation2 + $0x30] sm:$0xff]
    %v67 = vld [vmem:[#allocation2 + $0x38] sm:$0xff]
    %v68 = vld [vmem:[#allocation2 + $0x40] sm:$0xff]
    %v69 = vld [vmem:[#allocation2 + $0x48] sm:$0xff]
    %v70 = vld [vmem:[#allocation2 + $0x50] sm:$0xff]
    %v71 = vld [vmem:[#allocation2 + $0x58] sm:$0xff]
    %v72 = vld [vmem:[#allocation2 + $0x60] sm:$0xff]
    %v73 = vld [vmem:[#allocation2 + $0x68] sm:$0xff]
    %v74 = vld [vmem:[#allocation2 + $0x70] sm:$0xff]
    %v75 = vld [vmem:[#allocation2 + $0x78] sm:$0xff]
    %v76 = vld [vmem:[#allocation2 + $0x80] sm:$0xff]
    %v77 = vld [vmem:[#allocation2 + $0x88] sm:$0xff]
    %v78 = vld [vmem:[#allocation2 + $0x90] sm:$0xff]
    %v79 = vld [vmem:[#allocation2 + $0x98] sm:$0xff]
    %v80 = vld [vmem:[#allocation2 + $0xa0] sm:$0xff]
    %v81 = vld [vmem:[#allocation2 + $0xa8] sm:$0xff]
    %v82 = vld [vmem:[#allocation2 + $0xb0] sm:$0xff]
    %v83 = vld [vmem:[#allocation2 + $0xb8] sm:$0xff]
    %v84 = vld [vmem:[#allocation2 + $0xc0] sm:$0xff]
    %v85 = vld [vmem:[#allocation2 + $0xc8] sm:$0xff]
    %v86 = vld [vmem:[#allocation2 + $0xd0] sm:$0xff]
    %v87 = vld [vmem:[#allocation2 + $0xd8] sm:$0xff]
    %v88 = vld [vmem:[#allocation2 + $0xe0] sm:$0xff]
    %v89 = vld [vmem:[#allocation2 + $0xe8] sm:$0xff]
    %v90 = vld [vmem:[#allocation2 + $0xf0] sm:$0xff]
    %v91 = vld [vmem:[#allocation2 + $0xf8] sm:$0xff]
    %v92 = vld [vmem:[#allocation2 + $0x100] sm:$0xff]
    %v93 = vld [vmem:[#allocation2 + $0x108] sm:$0xff]
    %v94 = vld [vmem:[#allocation2 + $0x110] sm:$0xff]
    %v95 = vld [vmem:[#allocation2 + $0x118] sm:$0xff]
    %v96 = vld [vmem:[#allocation2 + $0x120] sm:$0xff]
    %v97 = vld [vmem:[#allocation2 + $0x128] sm:$0xff]
    %v98 = vld [vmem:[#allocation2 + $0x130] sm:$0xff]
    %v99 = vld [vmem:[#allocation2 + $0x138] sm:$0xff]
    %v100 = vld [vmem:[#allocation2 + $0x140] sm:$0xff]
    %v101 = vld [vmem:[#allocation2 + $0x148] sm:$0xff]
    %v102 = vld [vmem:[#allocation2 + $0x150] sm:$0xff]
    %v103 = vld [vmem:[#allocation2 + $0x158] sm:$0xff]
    %v104 = vld [vmem:[#allocation2 + $0x160] sm:$0xff]
    %v105 = vld [vmem:[#allocation2 + $0x168] sm:$0xff]
    %v106 = vld [vmem:[#allocation2 + $0x170] sm:$0xff]
    %v107 = vld [vmem:[#allocation2 + $0x178] sm:$0xff]
    %v108 = vld [vmem:[#allocation2 + $0x180] sm:$0xff]
    %v109 = vld [vmem:[#allocation2 + $0x188] sm:$0xff]
    %v110 = vld [vmem:[#allocation2 + $0x190] sm:$0xff]
    %v111 = vld [vmem:[#allocation2 + $0x198] sm:$0xff]
    %v112 = vld [vmem:[#allocation2 + $0x1a0] sm:$0xff]
    %v113 = vld [vmem:[#allocation2 + $0x1a8] sm:$0xff]
    %v114 = vld [vmem:[#allocation2 + $0x1b0] sm:$0xff]
    %v115 = vld [vmem:[#allocation2 + $0x1b8] sm:$0xff]
    %v116 = vld [vmem:[#allocation2 + $0x1c0] sm:$0xff]
    %v117 = vld [vmem:[#allocation2 + $0x1c8] sm:$0xff]
    %v118 = vld [vmem:[#allocation2 + $0x1d0] sm:$0xff]
    %v119 = vld [vmem:[#allocation2 + $0x1d8] sm:$0xff]
    %v120 = vld [vmem:[#allocation2 + $0x1e0] sm:$0xff]
    %v121 = vld [vmem:[#allocation2 + $0x1e8] sm:$0xff]
    %v122 = vld [vmem:[#allocation2 + $0x1f0] sm:$0xff]
    %v123 = vld [vmem:[#allocation2 + $0x1f8] sm:$0xff]
    %v124 = vld [vmem:[#allocation2 + $0x200] sm:$0xff]
    %v125 = vld [vmem:[#allocation2 + $0x208] sm:$0xff]
    %v126 = vld [vmem:[#allocation2 + $0x210] sm:$0xff]
    %v127 = vld [vmem:[#allocation2 + $0x218] sm:$0xff]
    %v128 = vld [vmem:[#allocation2 + $0x220] sm:$0xff]
    %v129 = vld [vmem:[#allocation2 + $0x228] sm:$0xff]
    %v130 = vld [vmem:[#allocation2 + $0x230] sm:$0xff]
    %v131 = vld [vmem:[#allocation2 + $0x238] sm:$0xff]
    %v132 = vld [vmem:[#allocation2 + $0x240] sm:$0xff]
    %v133 = vld [vmem:[#allocation2 + $0x248] sm:$0xff]
    %v134 = vld [vmem:[#allocation2 + $0x250] sm:$0xff]
    %v135 = vld [vmem:[#allocation2 + $0x258] sm:$0xff]
    %v136 = vld [vmem:[#allocation2 + $0x260] sm:$0xff]
    %v137 = vld [vmem:[#allocation2 + $0x268] sm:$0xff]
    %v138 = vld [vmem:[#allocation2 + $0x270] sm:$0xff]
    %v139 = vld [vmem:[#allocation2 + $0x278] sm:$0xff]
    %v140 = vld [vmem:[#allocation2 + $0x280] sm:$0xff]
    %v141 = vld [vmem:[#allocation2 + $0x288] sm:$0xff]
    %v142 = vld [vmem:[#allocation2 + $0x290] sm:$0xff]
    %v143 = vld [vmem:[#allocation2 + $0x298] sm:$0xff]
    %v144 = vld [vmem:[#allocation2 + $0x2a0] sm:$0xff]
    %v145 = vld [vmem:[#allocation2 + $0x2a8] sm:$0xff]
    %v146 = vld [vmem:[#allocation2 + $0x2b0] sm:$0xff]
    %v147 = vld [vmem:[#allocation2 + $0x2b8] sm:$0xff]
    %v148 = vld [vmem:[#allocation2 + $0x2c0] sm:$0xff]
    %v149 = vld [vmem:[#allocation2 + $0x2c8] sm:$0xff]
    %v150 = vld [vmem:[#allocation2 + $0x2d0] sm:$0xff]
    %v151 = vld [vmem:[#allocation2 + $0x2d8] sm:$0xff]
    %v152 = vld [vmem:[#allocation2 + $0x2e0] sm:$0xff]
    %v153 = vld [vmem:[#allocation2 + $0x2e8] sm:$0xff]
    %v154 = vld [vmem:[#allocation2 + $0x2f0] sm:$0xff]
    %v155 = vld [vmem:[#allocation2 + $0x2f8] sm:$0xff]
    %v156 = vld [vmem:[#allocation2 + $0x300] sm:$0xff]
    %v157 = vld [vmem:[#allocation2 + $0x308] sm:$0xff]
    %v158 = vld [vmem:[#allocation2 + $0x310] sm:$0xff]
    %v159 = vld [vmem:[#allocation2 + $0x318] sm:$0xff]
    %v160 = vld [vmem:[#allocation2 + $0x320] sm:$0xff]
    %v161 = vld [vmem:[#allocation2 + $0x328] sm:$0xff]
    %v162 = vld [vmem:[#allocation2 + $0x330] sm:$0xff]
    %v163 = vld [vmem:[#allocation2 + $0x338] sm:$0xff]
    %v164 = vld [vmem:[#allocation2 + $0x340] sm:$0xff]
    %v165 = vld [vmem:[#allocation2 + $0x348] sm:$0xff]
    %v166 = vld [vmem:[#allocation2 + $0x350] sm:$0xff]
    %v167 = vld [vmem:[#allocation2 + $0x358] sm:$0xff]
    %v168 = vld [vmem:[#allocation2 + $0x360] sm:$0xff]
    %v169 = vld [vmem:[#allocation2 + $0x368] sm:$0xff]
    %v170 = vld [vmem:[#allocation2 + $0x370] sm:$0xff]
    %v171 = vld [vmem:[#allocation2 + $0x378] sm:$0xff]
    %v172 = vld [vmem:[#allocation2 + $0x380] sm:$0xff]
    %v173 = vld [vmem:[#allocation2 + $0x388] sm:$0xff]
    %v174 = vld [vmem:[#allocation2 + $0x390] sm:$0xff]
    %v175 = vld [vmem:[#allocation2 + $0x398] sm:$0xff]
    %v176 = vld [vmem:[#allocation2 + $0x3a0] sm:$0xff]
    %v177 = vld [vmem:[#allocation2 + $0x3a8] sm:$0xff]
    %v178 = vld [vmem:[#allocation2 + $0x3b0] sm:$0xff]
    %v179 = vld [vmem:[#allocation2 + $0x3b8] sm:$0xff]
    %v180 = vld [vmem:[#allocation2 + $0x3c0] sm:$0xff]
    %v181 = vld [vmem:[#allocation2 + $0x3c8] sm:$0xff]
    %v182 = vld [vmem:[#allocation2 + $0x3d0] sm:$0xff]
    %v183 = vld [vmem:[#allocation2 + $0x3d8] sm:$0xff]
    %v184 = vld [vmem:[#allocation2 + $0x3e0] sm:$0xff]
    %v185 = vld [vmem:[#allocation2 + $0x3e8] sm:$0xff]
    %v186 = vld [vmem:[#allocation2 + $0x3f0] sm:$0xff]
    %v187 = vld [vmem:[#allocation2 + $0x3f8] sm:$0xff]
    %v188 = vld [vmem:[#allocation2 + $0x400] sm:$0xff]
    %v189 = vld [vmem:[#allocation2 + $0x408] sm:$0xff]
    %v190 = vld [vmem:[#allocation2 + $0x410] sm:$0xff]
    %v191 = vld [vmem:[#allocation2 + $0x418] sm:$0xff]
    %v192 = vld [vmem:[#allocation2 + $0x420] sm:$0xff]
    %v193 = vld [vmem:[#allocation2 + $0x428] sm:$0xff]
    %v194 = vld [vmem:[#allocation2 + $0x430] sm:$0xff]
    %v195 = vld [vmem:[#allocation2 + $0x438] sm:$0xff]
    %v196 = vld [vmem:[#allocation2 + $0x440] sm:$0xff]
    %v197 = vld [vmem:[#allocation2 + $0x448] sm:$0xff]
    %v198 = vld [vmem:[#allocation2 + $0x450] sm:$0xff]
    %v199 = vld [vmem:[#allocation2 + $0x458] sm:$0xff]
    %v200 = vld [vmem:[#allocation2 + $0x460] sm:$0xff]
    %v201 = vld [vmem:[#allocation2 + $0x468] sm:$0xff]
    %v202 = vld [vmem:[#allocation2 + $0x470] sm:$0xff]
    %v203 = vld [vmem:[#allocation2 + $0x478] sm:$0xff]
    %v204 = vld [vmem:[#allocation2 + $0x480] sm:$0xff]
    %v205 = vld [vmem:[#allocation2 + $0x488] sm:$0xff]
    %v206 = vld [vmem:[#allocation2 + $0x490] sm:$0xff]
    %v207 = vld [vmem:[#allocation2 + $0x498] sm:$0xff]
    %v208 = vld [vmem:[#allocation2 + $0x4a0] sm:$0xff]
    %v209 = vld [vmem:[#allocation2 + $0x4a8] sm:$0xff]
    %v210 = vld [vmem:[#allocation2 + $0x4b0] sm:$0xff]
    %v211 = vld [vmem:[#allocation2 + $0x4b8] sm:$0xff]
    %v212 = vld [vmem:[#allocation2 + $0x4c0] sm:$0xff]
    %v213 = vld [vmem:[#allocation2 + $0x4c8] sm:$0xff]
    %v214 = vld [vmem:[#allocation2 + $0x4d0] sm:$0xff]
    %v215 = vld [vmem:[#allocation2 + $0x4d8] sm:$0xff]
    %v216 = vld [vmem:[#allocation2 + $0x4e0] sm:$0xff]
    %v217 = vld [vmem:[#allocation2 + $0x4e8] sm:$0xff]
    %v218 = vld [vmem:[#allocation2 + $0x4f0] sm:$0xff]
    %v219 = vld [vmem:[#allocation2 + $0x4f8] sm:$0xff]
    %v220 = vld [vmem:[#allocation2 + $0x500] sm:$0xff]
    %v221 = vld [vmem:[#allocation2 + $0x508] sm:$0xff]
    %v222 = vld [vmem:[#allocation2 + $0x510] sm:$0xff]
    %v223 = vld [vmem:[#allocation2 + $0x518] sm:$0xff]
    %v224 = vld [vmem:[#allocation2 + $0x520] sm:$0xff]
    %v225 = vld [vmem:[#allocation2 + $0x528] sm:$0xff]
    %v226 = vld [vmem:[#allocation2 + $0x530] sm:$0xff]
    %v227 = vld [vmem:[#allocation2 + $0x538] sm:$0xff]
    %v228 = vld [vmem:[#allocation2 + $0x540] sm:$0xff]
    %v229 = vld [vmem:[#allocation2 + $0x548] sm:$0xff]
    %v230 = vld [vmem:[#allocation2 + $0x550] sm:$0xff]
    %v231 = vld [vmem:[#allocation2 + $0x558] sm:$0xff]
    %v232 = vld [vmem:[#allocation2 + $0x560] sm:$0xff]
    %v233 = vld [vmem:[#allocation2 + $0x568] sm:$0xff]
    %v234 = vld [vmem:[#allocation2 + $0x570] sm:$0xff]
    %v235 = vld [vmem:[#allocation2 + $0x578] sm:$0xff]
    %v236 = vld [vmem:[#allocation2 + $0x580] sm:$0xff]
    %v237 = vld [vmem:[#allocation2 + $0x588] sm:$0xff]
    %v238 = vld [vmem:[#allocation2 + $0x590] sm:$0xff]
    %v239 = vld [vmem:[#allocation2 + $0x598] sm:$0xff]
    %v240 = vld [vmem:[#allocation2 + $0x5a0] sm:$0xff]
    %v241 = vld [vmem:[#allocation2 + $0x5a8] sm:$0xff]
    %v242 = vld [vmem:[#allocation2 + $0x5b0] sm:$0xff]
    %v243 = vld [vmem:[#allocation2 + $0x5b8] sm:$0xff]
    %v244 = vld [vmem:[#allocation2 + $0x5c0] sm:$0xff]
    %v245 = vld [vmem:[#allocation2 + $0x5c8] sm:$0xff]
    %v246 = vld [vmem:[#allocation2 + $0x5d0] sm:$0xff]
    %v247 = vld [vmem:[#allocation2 + $0x5d8] sm:$0xff]
    %v248 = vld [vmem:[#allocation2 + $0x5e0] sm:$0xff]
    %v249 = vld [vmem:[#allocation2 + $0x5e8] sm:$0xff]
    %v250 = vld [vmem:[#allocation2 + $0x5f0] sm:$0xff]
    %v251 = vld [vmem:[#allocation2 + $0x5f8] sm:$0xff]
    %v252 = vld [vmem:[#allocation2 + $0x600] sm:$0xff]
    %v253 = vld [vmem:[#allocation2 + $0x608] sm:$0xff]
    %v254 = vld [vmem:[#allocation2 + $0x610] sm:$0xff]
    %v255 = vld [vmem:[#allocation2 + $0x618] sm:$0xff]
    %v256 = vld [vmem:[#allocation2 + $0x620] sm:$0xff]
    %v257 = vld [vmem:[#allocation2 + $0x628] sm:$0xff]
    %v258 = vld [vmem:[#allocation2 + $0x630] sm:$0xff]
    %v259 = vld [vmem:[#allocation2 + $0x638] sm:$0xff]
    %v260 = vld [vmem:[#allocation2 + $0x640] sm:$0xff]
    %v261 = vld [vmem:[#allocation2 + $0x648] sm:$0xff]
    %v262 = vld [vmem:[#allocation2 + $0x650] sm:$0xff]
    %v263 = vld [vmem:[#allocation2 + $0x658] sm:$0xff]
    %v264 = vld [vmem:[#allocation2 + $0x660] sm:$0xff]
    %v265 = vld [vmem:[#allocation2 + $0x668] sm:$0xff]
    %v266 = vld [vmem:[#allocation2 + $0x670] sm:$0xff]
    %v267 = vld [vmem:[#allocation2 + $0x678] sm:$0xff]
    %v268 = vld [vmem:[#allocation2 + $0x680] sm:$0xff]
    %v269 = vld [vmem:[#allocation2 + $0x688] sm:$0xff]
    %v270 = vld [vmem:[#allocation2 + $0x690] sm:$0xff]
    %v271 = vld [vmem:[#allocation2 + $0x698] sm:$0xff]
    %v272 = vld [vmem:[#allocation2 + $0x6a0] sm:$0xff]
    %v273 = vld [vmem:[#allocation2 + $0x6a8] sm:$0xff]
    %v274 = vld [vmem:[#allocation2 + $0x6b0] sm:$0xff]
    %v275 = vld [vmem:[#allocation2 + $0x6b8] sm:$0xff]
    %v276 = vld [vmem:[#allocation2 + $0x6c0] sm:$0xff]
    %v277 = vld [vmem:[#allocation2 + $0x6c8] sm:$0xff]
    %v278 = vld [vmem:[#allocation2 + $0x6d0] sm:$0xff]
    %v279 = vld [vmem:[#allocation2 + $0x6d8] sm:$0xff]
    %v280 = vld [vmem:[#allocation2 + $0x6e0] sm:$0xff]
    %v281 = vld [vmem:[#allocation2 + $0x6e8] sm:$0xff]
    %v282 = vld [vmem:[#allocation2 + $0x6f0] sm:$0xff]
    %v283 = vld [vmem:[#allocation2 + $0x6f8] sm:$0xff]
    %v284 = vld [vmem:[#allocation2 + $0x700] sm:$0xff]
    %v285 = vld [vmem:[#allocation2 + $0x708] sm:$0xff]
    %v286 = vld [vmem:[#allocation2 + $0x710] sm:$0xff]
    %v287 = vld [vmem:[#allocation2 + $0x718] sm:$0xff]
    %v288 = vld [vmem:[#allocation2 + $0x720] sm:$0xff]
    %v289 = vld [vmem:[#allocation2 + $0x728] sm:$0xff]
    %v290 = vld [vmem:[#allocation2 + $0x730] sm:$0xff]
    %v291 = vld [vmem:[#allocation2 + $0x738] sm:$0xff]
    %v292 = vld [vmem:[#allocation2 + $0x740] sm:$0xff]
    %v293 = vld [vmem:[#allocation2 + $0x748] sm:$0xff]
    %v294 = vld [vmem:[#allocation2 + $0x750] sm:$0xff]
    %v295 = vld [vmem:[#allocation2 + $0x758] sm:$0xff]
    %v296 = vld [vmem:[#allocation2 + $0x760] sm:$0xff]
    %v297 = vld [vmem:[#allocation2 + $0x768] sm:$0xff]
    %v298 = vld [vmem:[#allocation2 + $0x770] sm:$0xff]
    %v299 = vld [vmem:[#allocation2 + $0x778] sm:$0xff]
    %v300 = vld [vmem:[#allocation2 + $0x780] sm:$0xff]
    %v301 = vld [vmem:[#allocation2 + $0x788] sm:$0xff]
    %v302 = vld [vmem:[#allocation2 + $0x790] sm:$0xff]
    %v303 = vld [vmem:[#allocation2 + $0x798] sm:$0xff]
    %v304 = vld [vmem:[#allocation2 + $0x7a0] sm:$0xff]
    %v305 = vld [vmem:[#allocation2 + $0x7a8] sm:$0xff]
    %v306 = vld [vmem:[#allocation2 + $0x7b0] sm:$0xff]
    %v307 = vld [vmem:[#allocation2 + $0x7b8] sm:$0xff]
    %v308 = vld [vmem:[#allocation2 + $0x7c0] sm:$0xff]
    %v309 = vld [vmem:[#allocation2 + $0x7c8] sm:$0xff]
    %v310 = vld [vmem:[#allocation2 + $0x7d0] sm:$0xff]
    %v311 = vld [vmem:[#allocation2 + $0x7d8] sm:$0xff]
    %v312 = vld [vmem:[#allocation2 + $0x7e0] sm:$0xff]
    %v313 = vld [vmem:[#allocation2 + $0x7e8] sm:$0xff]
    %v314 = vld [vmem:[#allocation2 + $0x7f0] sm:$0xff]
    %v315 = vld [vmem:[#allocation2 + $0x7f8] sm:$0xff]
    %v316 = vld [vmem:[#allocation2 + $0x800] sm:$0xff]
    %v317 = vld [vmem:[#allocation2 + $0x808] sm:$0xff]
    %v318 = vld [vmem:[#allocation2 + $0x810] sm:$0xff]
    %v319 = vld [vmem:[#allocation2 + $0x818] sm:$0xff]
    %v320 = vld [vmem:[#allocation2 + $0x820] sm:$0xff]
    %v321 = vld [vmem:[#allocation2 + $0x828] sm:$0xff]
    %v322 = vld [vmem:[#allocation2 + $0x830] sm:$0xff]
    %v323 = vld [vmem:[#allocation2 + $0x838] sm:$0xff]
    %v324 = vld [vmem:[#allocation2 + $0x840] sm:$0xff]
    %v325 = vld [vmem:[#allocation2 + $0x848] sm:$0xff]
    %v326 = vld [vmem:[#allocation2 + $0x850] sm:$0xff]
    %v327 = vld [vmem:[#allocation2 + $0x858] sm:$0xff]
    %v328 = vld [vmem:[#allocation2 + $0x860] sm:$0xff]
    %v329 = vld [vmem:[#allocation2 + $0x868] sm:$0xff]
    %v330 = vld [vmem:[#allocation2 + $0x870] sm:$0xff]
    %v331 = vld [vmem:[#allocation2 + $0x878] sm:$0xff]
    %v332 = vld [vmem:[#allocation2 + $0x880] sm:$0xff]
    %v333 = vld [vmem:[#allocation2 + $0x888] sm:$0xff]
    %v334 = vld [vmem:[#allocation2 + $0x890] sm:$0xff]
    %v335 = vld [vmem:[#allocation2 + $0x898] sm:$0xff]
    %v336 = vld [vmem:[#allocation2 + $0x8a0] sm:$0xff]
    %v337 = vld [vmem:[#allocation2 + $0x8a8] sm:$0xff]
    %v338 = vld [vmem:[#allocation2 + $0x8b0] sm:$0xff]
    %v339 = vld [vmem:[#allocation2 + $0x8b8] sm:$0xff]
    %v340 = vld [vmem:[#allocation2 + $0x8c0] sm:$0xff]
    %v341 = vld [vmem:[#allocation2 + $0x8c8] sm:$0xff]
    %v342 = vld [vmem:[#allocation2 + $0x8d0] sm:$0xff]
    %v343 = vld [vmem:[#allocation2 + $0x8d8] sm:$0xff]
    %v344 = vld [vmem:[#allocation2 + $0x8e0] sm:$0xff]
    %v345 = vld [vmem:[#allocation2 + $0x8e8] sm:$0xff]
    %v346 = vld [vmem:[#allocation2 + $0x8f0] sm:$0xff]
    %v347 = vld [vmem:[#allocation2 + $0x8f8] sm:$0xff]
    %v348 = vld [vmem:[#allocation5] sm:$0xff]
    %v349 = vld [vmem:[#allocation5 + $0x8] sm:$0xff]
    %v350 = vld [vmem:[#allocation5 + $0x10] sm:$0xff]
    %v351 = vld [vmem:[#allocation5 + $0x18] sm:$0xff]
    %v352 = vld [vmem:[#allocation5 + $0x20] sm:$0xff]
    %v353 = vld [vmem:[#allocation5 + $0x28] sm:$0xff]
    %v354 = vld [vmem:[#allocation5 + $0x30] sm:$0xff]
    %v355 = vld [vmem:[#allocation5 + $0x38] sm:$0xff]
    %v356 = vld [vmem:[#allocation5 + $0x40] sm:$0xff]
    %v357 = vld [vmem:[#allocation5 + $0x48] sm:$0xff]
    %v358 = vld [vmem:[#allocation5 + $0x50] sm:$0xff]
    %v359 = vld [vmem:[#allocation5 + $0x58] sm:$0xff]
    %v360 = vld [vmem:[#allocation5 + $0x60] sm:$0xff]
    %v361 = vld [vmem:[#allocation5 + $0x68] sm:$0xff]
    %v362 = vld [vmem:[#allocation5 + $0x70] sm:$0xff]
    %v363 = vld [vmem:[#allocation5 + $0x78] sm:$0xff]
    %v364 = vld [vmem:[#allocation5 + $0x80] sm:$0xff]
    %v365 = vld [vmem:[#allocation5 + $0x88] sm:$0xff]
    %v366 = vld [vmem:[#allocation5 + $0x90] sm:$0xff]
    %v367 = vld [vmem:[#allocation5 + $0x98] sm:$0xff]
    %v368 = vld [vmem:[#allocation5 + $0xa0] sm:$0xff]
    %v369 = vld [vmem:[#allocation5 + $0xa8] sm:$0xff]
    %v370 = vld [vmem:[#allocation5 + $0xb0] sm:$0xff]
    %v371 = vld [vmem:[#allocation5 + $0xb8] sm:$0xff]
    %v372 = vld [vmem:[#allocation5 + $0xc0] sm:$0xff]
    %v373 = vld [vmem:[#allocation5 + $0xc8] sm:$0xff]
    %v374 = vld [vmem:[#allocation5 + $0xd0] sm:$0xff]
    %v375 = vld [vmem:[#allocation5 + $0xd8] sm:$0xff]
    %v376 = vld [vmem:[#allocation5 + $0xe0] sm:$0xff]
    %v377 = vld [vmem:[#allocation5 + $0xe8] sm:$0xff]
    %v378 = vld [vmem:[#allocation5 + $0xf0] sm:$0xff]
    %v379 = vld [vmem:[#allocation5 + $0xf8] sm:$0xff]
    %v380 = vld [vmem:[#allocation5 + $0x100] sm:$0xff]
    %v381 = vld [vmem:[#allocation5 + $0x108] sm:$0xff]
    %v382 = vld [vmem:[#allocation5 + $0x110] sm:$0xff]
    %v383 = vld [vmem:[#allocation5 + $0x118] sm:$0xff]
    %v384 = vld [vmem:[#allocation5 + $0x120] sm:$0xff]
    %v385 = vld [vmem:[#allocation5 + $0x128] sm:$0xff]
    %v386 = vld [vmem:[#allocation5 + $0x130] sm:$0xff]
    %v387 = vld [vmem:[#allocation5 + $0x138] sm:$0xff]
    %v388 = vld [vmem:[#allocation5 + $0x140] sm:$0xff]
    %v389 = vld [vmem:[#allocation5 + $0x148] sm:$0xff]
    %v390 = vld [vmem:[#allocation5 + $0x150] sm:$0xff]
    %v391 = vld [vmem:[#allocation5 + $0x158] sm:$0xff]
    %v392 = vld [vmem:[#allocation5 + $0x160] sm:$0xff]
    %v393 = vld [vmem:[#allocation5 + $0x168] sm:$0xff]
    %v394 = vld [vmem:[#allocation5 + $0x170] sm:$0xff]
    %v395 = vld [vmem:[#allocation5 + $0x178] sm:$0xff]
    %v396 = vld [vmem:[#allocation5 + $0x180] sm:$0xff]
    %v397 = vld [vmem:[#allocation5 + $0x188] sm:$0xff]
    %v398 = vld [vmem:[#allocation5 + $0x190] sm:$0xff]
    %v399 = vld [vmem:[#allocation5 + $0x198] sm:$0xff]
    %v400 = vld [vmem:[#allocation5 + $0x1a0] sm:$0xff]
    %v401 = vld [vmem:[#allocation5 + $0x1a8] sm:$0xff]
    %v402 = vld [vmem:[#allocation5 + $0x1b0] sm:$0xff]
    %v403 = vld [vmem:[#allocation5 + $0x1b8] sm:$0xff]
    %v404 = vld [vmem:[#allocation5 + $0x1c0] sm:$0xff]
    %v405 = vld [vmem:[#allocation5 + $0x1c8] sm:$0xff]
    %v406 = vld [vmem:[#allocation5 + $0x1d0] sm:$0xff]
    %v407 = vld [vmem:[#allocation5 + $0x1d8] sm:$0xff]
    %v408 = vld [vmem:[#allocation5 + $0x1e0] sm:$0xff]
    %v409 = vld [vmem:[#allocation5 + $0x1e8] sm:$0xff]
    %v410 = vld [vmem:[#allocation5 + $0x1f0] sm:$0xff]
    %v411 = vld [vmem:[#allocation5 + $0x1f8] sm:$0xff]
    %v412 = vld [vmem:[#allocation5 + $0x200] sm:$0xff]
    %v413 = vld [vmem:[#allocation5 + $0x208] sm:$0xff]
    %v414 = vld [vmem:[#allocation5 + $0x210] sm:$0xff]
    %v415 = vld [vmem:[#allocation5 + $0x218] sm:$0xff]
    %v416 = vld [vmem:[#allocation5 + $0x220] sm:$0xff]
    %v417 = vld [vmem:[#allocation5 + $0x228] sm:$0xff]
    %v418 = vld [vmem:[#allocation5 + $0x230] sm:$0xff]
    %v419 = vld [vmem:[#allocation5 + $0x238] sm:$0xff]
    %v420 = vld [vmem:[#allocation5 + $0x240] sm:$0xff]
    %v421 = vld [vmem:[#allocation5 + $0x248] sm:$0xff]
    %v422 = vld [vmem:[#allocation5 + $0x250] sm:$0xff]
    %v423 = vld [vmem:[#allocation5 + $0x258] sm:$0xff]
    %v424 = vld [vmem:[#allocation5 + $0x260] sm:$0xff]
    %v425 = vld [vmem:[#allocation5 + $0x268] sm:$0xff]
    %v426 = vld [vmem:[#allocation5 + $0x270] sm:$0xff]
    %v427 = vld [vmem:[#allocation5 + $0x278] sm:$0xff]
    %v428 = vld [vmem:[#allocation5 + $0x280] sm:$0xff]
    %v429 = vld [vmem:[#allocation5 + $0x288] sm:$0xff]
    %v430 = vld [vmem:[#allocation5 + $0x290] sm:$0xff]
    %v431 = vld [vmem:[#allocation5 + $0x298] sm:$0xff]
    %v432 = vld [vmem:[#allocation5 + $0x2a0] sm:$0xff]
    %v433 = vld [vmem:[#allocation5 + $0x2a8] sm:$0xff]
    %v434 = vld [vmem:[#allocation5 + $0x2b0] sm:$0xff]
    %v435 = vld [vmem:[#allocation5 + $0x2b8] sm:$0xff]
    %v436 = vld [vmem:[#allocation5 + $0x2c0] sm:$0xff]
    %v437 = vld [vmem:[#allocation5 + $0x2c8] sm:$0xff]
    %v438 = vld [vmem:[#allocation5 + $0x2d0] sm:$0xff]
    %v439 = vld [vmem:[#allocation5 + $0x2d8] sm:$0xff]
    %v440 = vld [vmem:[#allocation5 + $0x2e0] sm:$0xff]
    %v441 = vld [vmem:[#allocation5 + $0x2e8] sm:$0xff]
    %v442 = vld [vmem:[#allocation5 + $0x2f0] sm:$0xff]
    %v443 = vld [vmem:[#allocation5 + $0x2f8] sm:$0xff]
    %v444 = vld [vmem:[#allocation5 + $0x300] sm:$0xff]
    %v445 = vld [vmem:[#allocation5 + $0x308] sm:$0xff]
    %v446 = vld [vmem:[#allocation5 + $0x310] sm:$0xff]
    %v447 = vld [vmem:[#allocation5 + $0x318] sm:$0xff]
    %v448 = vld [vmem:[#allocation5 + $0x320] sm:$0xff]
    %v449 = vld [vmem:[#allocation5 + $0x328] sm:$0xff]
    %v450 = vld [vmem:[#allocation5 + $0x330] sm:$0xff]
    %v451 = vld [vmem:[#allocation5 + $0x338] sm:$0xff]
    %v452 = vld [vmem:[#allocation5 + $0x340] sm:$0xff]
    %v453 = vld [vmem:[#allocation5 + $0x348] sm:$0xff]
    %v454 = vld [vmem:[#allocation5 + $0x350] sm:$0xff]
    %v455 = vld [vmem:[#allocation5 + $0x358] sm:$0xff]
    %v456 = vld [vmem:[#allocation5 + $0x360] sm:$0xff]
    %v457 = vld [vmem:[#allocation5 + $0x368] sm:$0xff]
    %v458 = vld [vmem:[#allocation5 + $0x370] sm:$0xff]
    %v459 = vld [vmem:[#allocation5 + $0x378] sm:$0xff]
    %v460 = vld [vmem:[#allocation5 + $0x380] sm:$0xff]
    %v461 = vld [vmem:[#allocation5 + $0x388] sm:$0xff]
    %v462 = vld [vmem:[#allocation5 + $0x390] sm:$0xff]
    %v463 = vld [vmem:[#allocation5 + $0x398] sm:$0xff]
    %v464 = vld [vmem:[#allocation5 + $0x3a0] sm:$0xff]
    %v465 = vld [vmem:[#allocation5 + $0x3a8] sm:$0xff]
    %v466 = vld [vmem:[#allocation5 + $0x3b0] sm:$0xff]
    %v467 = vld [vmem:[#allocation5 + $0x3b8] sm:$0xff]
    %v468 = vld [vmem:[#allocation5 + $0x3c0] sm:$0xff]
    %v469 = vld [vmem:[#allocation5 + $0x3c8] sm:$0xff]
    %v470 = vld [vmem:[#allocation5 + $0x3d0] sm:$0xff]
    %v471 = vld [vmem:[#allocation5 + $0x3d8] sm:$0xff]
    %v472 = vld [vmem:[#allocation5 + $0x3e0] sm:$0xff]
    %v473 = vld [vmem:[#allocation5 + $0x3e8] sm:$0xff]
    %v474 = vld [vmem:[#allocation5 + $0x3f0] sm:$0xff]
    %v475 = vld [vmem:[#allocation5 + $0x3f8] sm:$0xff]
    %v476 = vld [vmem:[#allocation5 + $0x400] sm:$0xff]
    %v477 = vld [vmem:[#allocation5 + $0x408] sm:$0xff]
    %v478 = vld [vmem:[#allocation5 + $0x410] sm:$0xff]
    %v479 = vld [vmem:[#allocation5 + $0x418] sm:$0xff]
    %v480 = vld [vmem:[#allocation5 + $0x420] sm:$0xff]
    %v481 = vld [vmem:[#allocation5 + $0x428] sm:$0xff]
    %v482 = vld [vmem:[#allocation5 + $0x430] sm:$0xff]
    %v483 = vld [vmem:[#allocation5 + $0x438] sm:$0xff]
    %v484 = vld [vmem:[#allocation5 + $0x440] sm:$0xff]
    %v485 = vld [vmem:[#allocation5 + $0x448] sm:$0xff]
    %v486 = vld [vmem:[#allocation5 + $0x450] sm:$0xff]
    %v487 = vld [vmem:[#allocation5 + $0x458] sm:$0xff]
    %v488 = vld [vmem:[#allocation5 + $0x460] sm:$0xff]
    %v489 = vld [vmem:[#allocation5 + $0x468] sm:$0xff]
    %v490 = vld [vmem:[#allocation5 + $0x470] sm:$0xff]
    %v491 = vld [vmem:[#allocation5 + $0x478] sm:$0xff]
    %v492 = vld [vmem:[#allocation5 + $0x480] sm:$0xff]
    %v493 = vld [vmem:[#allocation5 + $0x488] sm:$0xff]
    %v494 = vld [vmem:[#allocation5 + $0x490] sm:$0xff]
    %v495 = vld [vmem:[#allocation5 + $0x498] sm:$0xff]
    %v496 = vld [vmem:[#allocation5 + $0x4a0] sm:$0xff]
    %v497 = vld [vmem:[#allocation5 + $0x4a8] sm:$0xff]
    %v498 = vld [vmem:[#allocation5 + $0x4b0] sm:$0xff]
    %v499 = vld [vmem:[#allocation5 + $0x4b8] sm:$0xff]
    %v500 = vld [vmem:[#allocation5 + $0x4c0] sm:$0xff]
    %v501 = vld [vmem:[#allocation5 + $0x4c8] sm:$0xff]
    %v502 = vld [vmem:[#allocation5 + $0x4d0] sm:$0xff]
    %v503 = vld [vmem:[#allocation5 + $0x4d8] sm:$0xff]
    %v504 = vld [vmem:[#allocation5 + $0x4e0] sm:$0xff]
    %v505 = vld [vmem:[#allocation5 + $0x4e8] sm:$0xff]
    %v506 = vld [vmem:[#allocation5 + $0x4f0] sm:$0xff]
    %v507 = vld [vmem:[#allocation5 + $0x4f8] sm:$0xff]
    %v508 = vld [vmem:[#allocation5 + $0x500] sm:$0xff]
    %v509 = vld [vmem:[#allocation5 + $0x508] sm:$0xff]
    %v510 = vld [vmem:[#allocation5 + $0x510] sm:$0xff]
    %v511 = vld [vmem:[#allocation5 + $0x518] sm:$0xff]
    %v512 = vld [vmem:[#allocation5 + $0x520] sm:$0xff]
    %v513 = vld [vmem:[#allocation5 + $0x528] sm:$0xff]
    %v514 = vld [vmem:[#allocation5 + $0x530] sm:$0xff]
    %v515 = vld [vmem:[#allocation5 + $0x538] sm:$0xff]
    %v516 = vld [vmem:[#allocation5 + $0x540] sm:$0xff]
    %v517 = vld [vmem:[#allocation5 + $0x548] sm:$0xff]
    %v518 = vld [vmem:[#allocation5 + $0x550] sm:$0xff]
    %v519 = vld [vmem:[#allocation5 + $0x558] sm:$0xff]
    %v520 = vld [vmem:[#allocation5 + $0x560] sm:$0xff]
    %v521 = vld [vmem:[#allocation5 + $0x568] sm:$0xff]
    %v522 = vld [vmem:[#allocation5 + $0x570] sm:$0xff]
    %v523 = vld [vmem:[#allocation5 + $0x578] sm:$0xff]
    %v524 = vld [vmem:[#allocation5 + $0x580] sm:$0xff]
    %v525 = vld [vmem:[#allocation5 + $0x588] sm:$0xff]
    %v526 = vld [vmem:[#allocation5 + $0x590] sm:$0xff]
    %v527 = vld [vmem:[#allocation5 + $0x598] sm:$0xff]
    %v528 = vld [vmem:[#allocation5 + $0x5a0] sm:$0xff]
    %v529 = vld [vmem:[#allocation5 + $0x5a8] sm:$0xff]
    %v530 = vld [vmem:[#allocation5 + $0x5b0] sm:$0xff]
    %v531 = vld [vmem:[#allocation5 + $0x5b8] sm:$0xff]
    %v532 = vld [vmem:[#allocation5 + $0x5c0] sm:$0xff]
    %v533 = vld [vmem:[#allocation5 + $0x5c8] sm:$0xff]
    %v534 = vld [vmem:[#allocation5 + $0x5d0] sm:$0xff]
    %v535 = vld [vmem:[#allocation5 + $0x5d8] sm:$0xff]
    %v536 = vld [vmem:[#allocation5 + $0x5e0] sm:$0xff]
    %v537 = vld [vmem:[#allocation5 + $0x5e8] sm:$0xff]
    %v538 = vld [vmem:[#allocation5 + $0x5f0] sm:$0xff]
    %v539 = vld [vmem:[#allocation5 + $0x5f8] sm:$0xff]
    %v540 = vld [vmem:[#allocation7] sm:$0x3]
    %v542 = vperm.slane %v540, 0
    %v543 = vperm.slane %v540, 1
    %546 = vmatpush.msra.mxu0 %v378
    %547 = vmatpush.msra.mxu0 %v376
    %548 = vmatpush.msra.mxu0 %v374
    %549 = vmatpush.msra.mxu0 %v372
    %550 = vmatpush.msra.mxu0 %v370
    %551 = vmatpush.msra.mxu0 %v368
    %552 = vmatpush.msra.mxu0 %v366
    %553 = vmatpush.msra.mxu0 %v364
    %554 = vmatpush.msra.mxu0 %v362
    %555 = vmatpush.msra.mxu0 %v360
    %556 = vmatpush.msra.mxu0 %v358
    %557 = vmatpush.msra.mxu0 %v356
    %558 = vmatpush.msra.mxu0 %v354
    %559 = vmatpush.msra.mxu0 %v352
    %560 = vmatpush.msra.mxu0 %v350
    %561 = vmatpush.msra.mxu0 %v348
    %562 = vmatmul.f32.gmra.mxu0 %v60
    %v563 = vpop.f32.mrf.mxu0
    %v564 = vadd.f32 %v542, %v563
    %565 = vmatmul.f32.gmra.mxu0 %v66
    %v566 = vpop.f32.mrf.mxu0
    %v567 = vadd.f32 %v542, %v566
    %568 = vmatmul.f32.gmra.mxu0 %v72
    %v569 = vpop.f32.mrf.mxu0
    %v570 = vadd.f32 %v542, %v569
    %571 = vmatmul.f32.gmra.mxu0 %v78
    %v572 = vpop.f32.mrf.mxu0
    %v573 = vadd.f32 %v542, %v572
    %574 = vmatmul.f32.gmra.mxu0 %v84
    %v575 = vpop.f32.mrf.mxu0
    %v576 = vadd.f32 %v542, %v575
    %577 = vmatmul.f32.gmra.mxu0 %v90
    %v578 = vpop.f32.mrf.mxu0
    %v579 = vadd.f32 %v542, %v578
    %580 = vmatmul.f32.gmra.mxu0 %v96
    %v581 = vpop.f32.mrf.mxu0
    %v582 = vadd.f32 %v542, %v581
    %583 = vmatmul.f32.gmra.mxu0 %v102
    %v584 = vpop.f32.mrf.mxu0
    %v585 = vadd.f32 %v542, %v584
    %586 = vmatmul.f32.gmra.mxu0 %v108
    %v587 = vpop.f32.mrf.mxu0
    %v588 = vadd.f32 %v542, %v587
    %589 = vmatmul.f32.gmra.mxu0 %v114
    %v590 = vpop.f32.mrf.mxu0
    %v591 = vadd.f32 %v542, %v590
    %592 = vmatmul.f32.gmra.mxu0 %v120
    %v593 = vpop.f32.mrf.mxu0
    %v594 = vadd.f32 %v542, %v593
    %595 = vmatmul.f32.gmra.mxu0 %v126
    %v596 = vpop.f32.mrf.mxu0
    %v597 = vadd.f32 %v542, %v596
    %598 = vmatmul.f32.gmra.mxu0 %v132
    %v599 = vpop.f32.mrf.mxu0
    %v600 = vadd.f32 %v542, %v599
    %601 = vmatmul.f32.gmra.mxu0 %v138
    %v602 = vpop.f32.mrf.mxu0
    %v603 = vadd.f32 %v542, %v602
    %604 = vmatmul.f32.gmra.mxu0 %v144
    %v605 = vpop.f32.mrf.mxu0
    %v606 = vadd.f32 %v542, %v605
    %607 = vmatmul.f32.gmra.mxu0 %v150
    %v608 = vpop.f32.mrf.mxu0
    %v609 = vadd.f32 %v542, %v608
    %610 = vmatmul.f32.gmra.mxu0 %v156
    %v611 = vpop.f32.mrf.mxu0
    %v612 = vadd.f32 %v542, %v611
    %613 = vmatmul.f32.gmra.mxu0 %v162
    %v614 = vpop.f32.mrf.mxu0
    %v615 = vadd.f32 %v542, %v614
    %616 = vmatmul.f32.gmra.mxu0 %v168
    %v617 = vpop.f32.mrf.mxu0
    %v618 = vadd.f32 %v542, %v617
    %619 = vmatmul.f32.gmra.mxu0 %v174
    %v620 = vpop.f32.mrf.mxu0
    %v621 = vadd.f32 %v542, %v620
    %622 = vmatmul.f32.gmra.mxu0 %v180
    %v623 = vpop.f32.mrf.mxu0
    %v624 = vadd.f32 %v542, %v623
    %625 = vmatmul.f32.gmra.mxu0 %v186
    %v626 = vpop.f32.mrf.mxu0
    %v627 = vadd.f32 %v542, %v626
    %628 = vmatmul.f32.gmra.mxu0 %v192
    %v629 = vpop.f32.mrf.mxu0
    %v630 = vadd.f32 %v542, %v629
    %631 = vmatmul.f32.gmra.mxu0 %v198
    %v632 = vpop.f32.mrf.mxu0
    %v633 = vadd.f32 %v542, %v632
    %634 = vmatmul.f32.gmra.mxu0 %v204
    %v635 = vpop.f32.mrf.mxu0
    %v636 = vadd.f32 %v542, %v635
    %637 = vmatmul.f32.gmra.mxu0 %v210
    %v638 = vpop.f32.mrf.mxu0
    %v639 = vadd.f32 %v542, %v638
    %640 = vmatmul.f32.gmra.mxu0 %v216
    %v641 = vpop.f32.mrf.mxu0
    %v642 = vadd.f32 %v542, %v641
    %643 = vmatmul.f32.gmra.mxu0 %v222
    %v644 = vpop.f32.mrf.mxu0
    %v645 = vadd.f32 %v542, %v644
    %646 = vmatmul.f32.gmra.mxu0 %v228
    %v647 = vpop.f32.mrf.mxu0
    %v648 = vadd.f32 %v542, %v647
    %649 = vmatmul.f32.gmra.mxu0 %v234
    %v650 = vpop.f32.mrf.mxu0
    %v651 = vadd.f32 %v542, %v650
    %652 = vmatmul.f32.gmra.mxu0 %v240
    %v653 = vpop.f32.mrf.mxu0
    %v654 = vadd.f32 %v542, %v653
    %655 = vmatmul.f32.gmra.mxu0 %v246
    %v656 = vpop.f32.mrf.mxu0
    %v657 = vadd.f32 %v542, %v656
    %658 = vmatmul.f32.gmra.mxu0 %v252
    %v659 = vpop.f32.mrf.mxu0
    %v660 = vadd.f32 %v542, %v659
    %661 = vmatmul.f32.gmra.mxu0 %v258
    %v662 = vpop.f32.mrf.mxu0
    %v663 = vadd.f32 %v542, %v662
    %664 = vmatmul.f32.gmra.mxu0 %v264
    %v665 = vpop.f32.mrf.mxu0
    %v666 = vadd.f32 %v542, %v665
    %667 = vmatmul.f32.gmra.mxu0 %v270
    %v668 = vpop.f32.mrf.mxu0
    %v669 = vadd.f32 %v542, %v668
    %670 = vmatmul.f32.gmra.mxu0 %v276
    %v671 = vpop.f32.mrf.mxu0
    %v672 = vadd.f32 %v542, %v671
    %673 = vmatmul.f32.gmra.mxu0 %v282
    %v674 = vpop.f32.mrf.mxu0
    %v675 = vadd.f32 %v542, %v674
    %676 = vmatmul.f32.gmra.mxu0 %v288
    %v677 = vpop.f32.mrf.mxu0
    %v678 = vadd.f32 %v542, %v677
    %679 = vmatmul.f32.gmra.mxu0 %v294
    %v680 = vpop.f32.mrf.mxu0
    %v681 = vadd.f32 %v542, %v680
    %682 = vmatmul.f32.gmra.mxu0 %v300
    %v683 = vpop.f32.mrf.mxu0
    %v684 = vadd.f32 %v542, %v683
    %685 = vmatmul.f32.gmra.mxu0 %v306
    %v686 = vpop.f32.mrf.mxu0
    %v687 = vadd.f32 %v542, %v686
    %688 = vmatmul.f32.gmra.mxu0 %v312
    %v689 = vpop.f32.mrf.mxu0
    %v690 = vadd.f32 %v542, %v689
    %691 = vmatmul.f32.gmra.mxu0 %v318
    %v692 = vpop.f32.mrf.mxu0
    %v693 = vadd.f32 %v542, %v692
    %694 = vmatmul.f32.gmra.mxu0 %v324
    %v695 = vpop.f32.mrf.mxu0
    %v696 = vadd.f32 %v542, %v695
    %697 = vmatmul.f32.gmra.mxu0 %v330
    %v698 = vpop.f32.mrf.mxu0
    %v699 = vadd.f32 %v542, %v698
    %700 = vmatmul.f32.gmra.mxu0 %v336
    %v701 = vpop.f32.mrf.mxu0
    %v702 = vadd.f32 %v542, %v701
    %703 = vmatmul.f32.gmra.mxu0 %v342
    %v704 = vpop.f32.mrf.mxu0
    %v705 = vadd.f32 %v542, %v704
    %706 = vdwg.mxu0
    %707 = vmatpush.msra.mxu0 %v410
    %708 = vmatpush.msra.mxu0 %v408
    %709 = vmatpush.msra.mxu0 %v406
    %710 = vmatpush.msra.mxu0 %v404
    %711 = vmatpush.msra.mxu0 %v402
    %712 = vmatpush.msra.mxu0 %v400
    %713 = vmatpush.msra.mxu0 %v398
    %714 = vmatpush.msra.mxu0 %v396
    %715 = vmatpush.msra.mxu0 %v394
    %716 = vmatpush.msra.mxu0 %v392
    %717 = vmatpush.msra.mxu0 %v390
    %718 = vmatpush.msra.mxu0 %v388
    %719 = vmatpush.msra.mxu0 %v386
    %720 = vmatpush.msra.mxu0 %v384
    %721 = vmatpush.msra.mxu0 %v382
    %722 = vmatpush.msra.mxu0 %v380
    %723 = vmatmul.f32.gmra.mxu0 %v61
    %v724 = vpop.f32.mrf.mxu0
    %v725 = vadd.f32 %v564, %v724
    %726 = vmatmul.f32.gmra.mxu0 %v67
    %v727 = vpop.f32.mrf.mxu0
    %v728 = vadd.f32 %v567, %v727
    %729 = vmatmul.f32.gmra.mxu0 %v73
    %v730 = vpop.f32.mrf.mxu0
    %v731 = vadd.f32 %v570, %v730
    %732 = vmatmul.f32.gmra.mxu0 %v79
    %v733 = vpop.f32.mrf.mxu0
    %v734 = vadd.f32 %v573, %v733
    %735 = vmatmul.f32.gmra.mxu0 %v85
    %v736 = vpop.f32.mrf.mxu0
    %v737 = vadd.f32 %v576, %v736
    %738 = vmatmul.f32.gmra.mxu0 %v91
    %v739 = vpop.f32.mrf.mxu0
    %v740 = vadd.f32 %v579, %v739
    %741 = vmatmul.f32.gmra.mxu0 %v97
    %v742 = vpop.f32.mrf.mxu0
    %v743 = vadd.f32 %v582, %v742
    %744 = vmatmul.f32.gmra.mxu0 %v103
    %v745 = vpop.f32.mrf.mxu0
    %v746 = vadd.f32 %v585, %v745
    %747 = vmatmul.f32.gmra.mxu0 %v109
    %v748 = vpop.f32.mrf.mxu0
    %v749 = vadd.f32 %v588, %v748
    %750 = vmatmul.f32.gmra.mxu0 %v115
    %v751 = vpop.f32.mrf.mxu0
    %v752 = vadd.f32 %v591, %v751
    %753 = vmatmul.f32.gmra.mxu0 %v121
    %v754 = vpop.f32.mrf.mxu0
    %v755 = vadd.f32 %v594, %v754
    %756 = vmatmul.f32.gmra.mxu0 %v127
    %v757 = vpop.f32.mrf.mxu0
    %v758 = vadd.f32 %v597, %v757
    %759 = vmatmul.f32.gmra.mxu0 %v133
    %v760 = vpop.f32.mrf.mxu0
    %v761 = vadd.f32 %v600, %v760
    %762 = vmatmul.f32.gmra.mxu0 %v139
    %v763 = vpop.f32.mrf.mxu0
    %v764 = vadd.f32 %v603, %v763
    %765 = vmatmul.f32.gmra.mxu0 %v145
    %v766 = vpop.f32.mrf.mxu0
    %v767 = vadd.f32 %v606, %v766
    %768 = vmatmul.f32.gmra.mxu0 %v151
    %v769 = vpop.f32.mrf.mxu0
    %v770 = vadd.f32 %v609, %v769
    %771 = vmatmul.f32.gmra.mxu0 %v157
    %v772 = vpop.f32.mrf.mxu0
    %v773 = vadd.f32 %v612, %v772
    %774 = vmatmul.f32.gmra.mxu0 %v163
    %v775 = vpop.f32.mrf.mxu0
    %v776 = vadd.f32 %v615, %v775
    %777 = vmatmul.f32.gmra.mxu0 %v169
    %v778 = vpop.f32.mrf.mxu0
    %v779 = vadd.f32 %v618, %v778
    %780 = vmatmul.f32.gmra.mxu0 %v175
    %v781 = vpop.f32.mrf.mxu0
    %v782 = vadd.f32 %v621, %v781
    %783 = vmatmul.f32.gmra.mxu0 %v181
    %v784 = vpop.f32.mrf.mxu0
    %v785 = vadd.f32 %v624, %v784
    %786 = vmatmul.f32.gmra.mxu0 %v187
    %v787 = vpop.f32.mrf.mxu0
    %v788 = vadd.f32 %v627, %v787
    %789 = vmatmul.f32.gmra.mxu0 %v193
    %v790 = vpop.f32.mrf.mxu0
    %v791 = vadd.f32 %v630, %v790
    %792 = vmatmul.f32.gmra.mxu0 %v199
    %v793 = vpop.f32.mrf.mxu0
    %v794 = vadd.f32 %v633, %v793
    %795 = vmatmul.f32.gmra.mxu0 %v205
    %v796 = vpop.f32.mrf.mxu0
    %v797 = vadd.f32 %v636, %v796
    %798 = vmatmul.f32.gmra.mxu0 %v211
    %v799 = vpop.f32.mrf.mxu0
    %v800 = vadd.f32 %v639, %v799
    %801 = vmatmul.f32.gmra.mxu0 %v217
    %v802 = vpop.f32.mrf.mxu0
    %v803 = vadd.f32 %v642, %v802
    %804 = vmatmul.f32.gmra.mxu0 %v223
    %v805 = vpop.f32.mrf.mxu0
    %v806 = vadd.f32 %v645, %v805
    %807 = vmatmul.f32.gmra.mxu0 %v229
    %v808 = vpop.f32.mrf.mxu0
    %v809 = vadd.f32 %v648, %v808
    %810 = vmatmul.f32.gmra.mxu0 %v235
    %v811 = vpop.f32.mrf.mxu0
    %v812 = vadd.f32 %v651, %v811
    %813 = vmatmul.f32.gmra.mxu0 %v241
    %v814 = vpop.f32.mrf.mxu0
    %v815 = vadd.f32 %v654, %v814
    %816 = vmatmul.f32.gmra.mxu0 %v247
    %v817 = vpop.f32.mrf.mxu0
    %v818 = vadd.f32 %v657, %v817
    %819 = vmatmul.f32.gmra.mxu0 %v253
    %v820 = vpop.f32.mrf.mxu0
    %v821 = vadd.f32 %v660, %v820
    %822 = vmatmul.f32.gmra.mxu0 %v259
    %v823 = vpop.f32.mrf.mxu0
    %v824 = vadd.f32 %v663, %v823
    %825 = vmatmul.f32.gmra.mxu0 %v265
    %v826 = vpop.f32.mrf.mxu0
    %v827 = vadd.f32 %v666, %v826
    %828 = vmatmul.f32.gmra.mxu0 %v271
    %v829 = vpop.f32.mrf.mxu0
    %v830 = vadd.f32 %v669, %v829
    %831 = vmatmul.f32.gmra.mxu0 %v277
    %v832 = vpop.f32.mrf.mxu0
    %v833 = vadd.f32 %v672, %v832
    %834 = vmatmul.f32.gmra.mxu0 %v283
    %v835 = vpop.f32.mrf.mxu0
    %v836 = vadd.f32 %v675, %v835
    %837 = vmatmul.f32.gmra.mxu0 %v289
    %v838 = vpop.f32.mrf.mxu0
    %v839 = vadd.f32 %v678, %v838
    %840 = vmatmul.f32.gmra.mxu0 %v295
    %v841 = vpop.f32.mrf.mxu0
    %v842 = vadd.f32 %v681, %v841
    %843 = vmatmul.f32.gmra.mxu0 %v301
    %v844 = vpop.f32.mrf.mxu0
    %v845 = vadd.f32 %v684, %v844
    %846 = vmatmul.f32.gmra.mxu0 %v307
    %v847 = vpop.f32.mrf.mxu0
    %v848 = vadd.f32 %v687, %v847
    %849 = vmatmul.f32.gmra.mxu0 %v313
    %v850 = vpop.f32.mrf.mxu0
    %v851 = vadd.f32 %v690, %v850
    %852 = vmatmul.f32.gmra.mxu0 %v319
    %v853 = vpop.f32.mrf.mxu0
    %v854 = vadd.f32 %v693, %v853
    %855 = vmatmul.f32.gmra.mxu0 %v325
    %v856 = vpop.f32.mrf.mxu0
    %v857 = vadd.f32 %v696, %v856
    %858 = vmatmul.f32.gmra.mxu0 %v331
    %v859 = vpop.f32.mrf.mxu0
    %v860 = vadd.f32 %v699, %v859
    %861 = vmatmul.f32.gmra.mxu0 %v337
    %v862 = vpop.f32.mrf.mxu0
    %v863 = vadd.f32 %v702, %v862
    %864 = vmatmul.f32.gmra.mxu0 %v343
    %v865 = vpop.f32.mrf.mxu0
    %v866 = vadd.f32 %v705, %v865
    %867 = vdwg.mxu0
    %868 = vmatpush.msra.mxu0 %v442
    %869 = vmatpush.msra.mxu0 %v440
    %870 = vmatpush.msra.mxu0 %v438
    %871 = vmatpush.msra.mxu0 %v436
    %872 = vmatpush.msra.mxu0 %v434
    %873 = vmatpush.msra.mxu0 %v432
    %874 = vmatpush.msra.mxu0 %v430
    %875 = vmatpush.msra.mxu0 %v428
    %876 = vmatpush.msra.mxu0 %v426
    %877 = vmatpush.msra.mxu0 %v424
    %878 = vmatpush.msra.mxu0 %v422
    %879 = vmatpush.msra.mxu0 %v420
    %880 = vmatpush.msra.mxu0 %v418
    %881 = vmatpush.msra.mxu0 %v416
    %882 = vmatpush.msra.mxu0 %v414
    %883 = vmatpush.msra.mxu0 %v412
    %884 = vmatmul.f32.gmra.mxu0 %v62
    %v885 = vpop.f32.mrf.mxu0
    %v886 = vadd.f32 %v725, %v885
    %887 = vmatmul.f32.gmra.mxu0 %v68
    %v888 = vpop.f32.mrf.mxu0
    %v889 = vadd.f32 %v728, %v888
    %890 = vmatmul.f32.gmra.mxu0 %v74
    %v891 = vpop.f32.mrf.mxu0
    %v892 = vadd.f32 %v731, %v891
    %893 = vmatmul.f32.gmra.mxu0 %v80
    %v894 = vpop.f32.mrf.mxu0
    %v895 = vadd.f32 %v734, %v894
    %896 = vmatmul.f32.gmra.mxu0 %v86
    %v897 = vpop.f32.mrf.mxu0
    %v898 = vadd.f32 %v737, %v897
    %899 = vmatmul.f32.gmra.mxu0 %v92
    %v900 = vpop.f32.mrf.mxu0
    %v901 = vadd.f32 %v740, %v900
    %902 = vmatmul.f32.gmra.mxu0 %v98
    %v903 = vpop.f32.mrf.mxu0
    %v904 = vadd.f32 %v743, %v903
    %905 = vmatmul.f32.gmra.mxu0 %v104
    %v906 = vpop.f32.mrf.mxu0
    %v907 = vadd.f32 %v746, %v906
    %908 = vmatmul.f32.gmra.mxu0 %v110
    %v909 = vpop.f32.mrf.mxu0
    %v910 = vadd.f32 %v749, %v909
    %911 = vmatmul.f32.gmra.mxu0 %v116
    %v912 = vpop.f32.mrf.mxu0
    %v913 = vadd.f32 %v752, %v912
    %914 = vmatmul.f32.gmra.mxu0 %v122
    %v915 = vpop.f32.mrf.mxu0
    %v916 = vadd.f32 %v755, %v915
    %917 = vmatmul.f32.gmra.mxu0 %v128
    %v918 = vpop.f32.mrf.mxu0
    %v919 = vadd.f32 %v758, %v918
    %920 = vmatmul.f32.gmra.mxu0 %v134
    %v921 = vpop.f32.mrf.mxu0
    %v922 = vadd.f32 %v761, %v921
    %923 = vmatmul.f32.gmra.mxu0 %v140
    %v924 = vpop.f32.mrf.mxu0
    %v925 = vadd.f32 %v764, %v924
    %926 = vmatmul.f32.gmra.mxu0 %v146
    %v927 = vpop.f32.mrf.mxu0
    %v928 = vadd.f32 %v767, %v927
    %929 = vmatmul.f32.gmra.mxu0 %v152
    %v930 = vpop.f32.mrf.mxu0
    %v931 = vadd.f32 %v770, %v930
    %932 = vmatmul.f32.gmra.mxu0 %v158
    %v933 = vpop.f32.mrf.mxu0
    %v934 = vadd.f32 %v773, %v933
    %935 = vmatmul.f32.gmra.mxu0 %v164
    %v936 = vpop.f32.mrf.mxu0
    %v937 = vadd.f32 %v776, %v936
    %938 = vmatmul.f32.gmra.mxu0 %v170
    %v939 = vpop.f32.mrf.mxu0
    %v940 = vadd.f32 %v779, %v939
    %941 = vmatmul.f32.gmra.mxu0 %v176
    %v942 = vpop.f32.mrf.mxu0
    %v943 = vadd.f32 %v782, %v942
    %944 = vmatmul.f32.gmra.mxu0 %v182
    %v945 = vpop.f32.mrf.mxu0
    %v946 = vadd.f32 %v785, %v945
    %947 = vmatmul.f32.gmra.mxu0 %v188
    %v948 = vpop.f32.mrf.mxu0
    %v949 = vadd.f32 %v788, %v948
    %950 = vmatmul.f32.gmra.mxu0 %v194
    %v951 = vpop.f32.mrf.mxu0
    %v952 = vadd.f32 %v791, %v951
    %953 = vmatmul.f32.gmra.mxu0 %v200
    %v954 = vpop.f32.mrf.mxu0
    %v955 = vadd.f32 %v794, %v954
    %956 = vmatmul.f32.gmra.mxu0 %v206
    %v957 = vpop.f32.mrf.mxu0
    %v958 = vadd.f32 %v797, %v957
    %959 = vmatmul.f32.gmra.mxu0 %v212
    %v960 = vpop.f32.mrf.mxu0
    %v961 = vadd.f32 %v800, %v960
    %962 = vmatmul.f32.gmra.mxu0 %v218
    %v963 = vpop.f32.mrf.mxu0
    %v964 = vadd.f32 %v803, %v963
    %965 = vmatmul.f32.gmra.mxu0 %v224
    %v966 = vpop.f32.mrf.mxu0
    %v967 = vadd.f32 %v806, %v966
    %968 = vmatmul.f32.gmra.mxu0 %v230
    %v969 = vpop.f32.mrf.mxu0
    %v970 = vadd.f32 %v809, %v969
    %971 = vmatmul.f32.gmra.mxu0 %v236
    %v972 = vpop.f32.mrf.mxu0
    %v973 = vadd.f32 %v812, %v972
    %974 = vmatmul.f32.gmra.mxu0 %v242
    %v975 = vpop.f32.mrf.mxu0
    %v976 = vadd.f32 %v815, %v975
    %977 = vmatmul.f32.gmra.mxu0 %v248
    %v978 = vpop.f32.mrf.mxu0
    %v979 = vadd.f32 %v818, %v978
    %980 = vmatmul.f32.gmra.mxu0 %v254
    %v981 = vpop.f32.mrf.mxu0
    %v982 = vadd.f32 %v821, %v981
    %983 = vmatmul.f32.gmra.mxu0 %v260
    %v984 = vpop.f32.mrf.mxu0
    %v985 = vadd.f32 %v824, %v984
    %986 = vmatmul.f32.gmra.mxu0 %v266
    %v987 = vpop.f32.mrf.mxu0
    %v988 = vadd.f32 %v827, %v987
    %989 = vmatmul.f32.gmra.mxu0 %v272
    %v990 = vpop.f32.mrf.mxu0
    %v991 = vadd.f32 %v830, %v990
    %992 = vmatmul.f32.gmra.mxu0 %v278
    %v993 = vpop.f32.mrf.mxu0
    %v994 = vadd.f32 %v833, %v993
    %995 = vmatmul.f32.gmra.mxu0 %v284
    %v996 = vpop.f32.mrf.mxu0
    %v997 = vadd.f32 %v836, %v996
    %998 = vmatmul.f32.gmra.mxu0 %v290
    %v999 = vpop.f32.mrf.mxu0
    %v1000 = vadd.f32 %v839, %v999
    %1001 = vmatmul.f32.gmra.mxu0 %v296
    %v1002 = vpop.f32.mrf.mxu0
    %v1003 = vadd.f32 %v842, %v1002
    %1004 = vmatmul.f32.gmra.mxu0 %v302
    %v1005 = vpop.f32.mrf.mxu0
    %v1006 = vadd.f32 %v845, %v1005
    %1007 = vmatmul.f32.gmra.mxu0 %v308
    %v1008 = vpop.f32.mrf.mxu0
    %v1009 = vadd.f32 %v848, %v1008
    %1010 = vmatmul.f32.gmra.mxu0 %v314
    %v1011 = vpop.f32.mrf.mxu0
    %v1012 = vadd.f32 %v851, %v1011
    %1013 = vmatmul.f32.gmra.mxu0 %v320
    %v1014 = vpop.f32.mrf.mxu0
    %v1015 = vadd.f32 %v854, %v1014
    %1016 = vmatmul.f32.gmra.mxu0 %v326
    %v1017 = vpop.f32.mrf.mxu0
    %v1018 = vadd.f32 %v857, %v1017
    %1019 = vmatmul.f32.gmra.mxu0 %v332
    %v1020 = vpop.f32.mrf.mxu0
    %v1021 = vadd.f32 %v860, %v1020
    %1022 = vmatmul.f32.gmra.mxu0 %v338
    %v1023 = vpop.f32.mrf.mxu0
    %v1024 = vadd.f32 %v863, %v1023
    %1025 = vmatmul.f32.gmra.mxu0 %v344
    %v1026 = vpop.f32.mrf.mxu0
    %v1027 = vadd.f32 %v866, %v1026
    %1028 = vdwg.mxu0
    %1029 = vmatpush.msra.mxu0 %v474
    %1030 = vmatpush.msra.mxu0 %v472
    %1031 = vmatpush.msra.mxu0 %v470
    %1032 = vmatpush.msra.mxu0 %v468
    %1033 = vmatpush.msra.mxu0 %v466
    %1034 = vmatpush.msra.mxu0 %v464
    %1035 = vmatpush.msra.mxu0 %v462
    %1036 = vmatpush.msra.mxu0 %v460
    %1037 = vmatpush.msra.mxu0 %v458
    %1038 = vmatpush.msra.mxu0 %v456
    %1039 = vmatpush.msra.mxu0 %v454
    %1040 = vmatpush.msra.mxu0 %v452
    %1041 = vmatpush.msra.mxu0 %v450
    %1042 = vmatpush.msra.mxu0 %v448
    %1043 = vmatpush.msra.mxu0 %v446
    %1044 = vmatpush.msra.mxu0 %v444
    %1045 = vmatmul.f32.gmra.mxu0 %v63
    %v1046 = vpop.f32.mrf.mxu0
    %v1047 = vadd.f32 %v886, %v1046
    %1048 = vmatmul.f32.gmra.mxu0 %v69
    %v1049 = vpop.f32.mrf.mxu0
    %v1050 = vadd.f32 %v889, %v1049
    %1051 = vmatmul.f32.gmra.mxu0 %v75
    %v1052 = vpop.f32.mrf.mxu0
    %v1053 = vadd.f32 %v892, %v1052
    %1054 = vmatmul.f32.gmra.mxu0 %v81
    %v1055 = vpop.f32.mrf.mxu0
    %v1056 = vadd.f32 %v895, %v1055
    %1057 = vmatmul.f32.gmra.mxu0 %v87
    %v1058 = vpop.f32.mrf.mxu0
    %v1059 = vadd.f32 %v898, %v1058
    %1060 = vmatmul.f32.gmra.mxu0 %v93
    %v1061 = vpop.f32.mrf.mxu0
    %v1062 = vadd.f32 %v901, %v1061
    %1063 = vmatmul.f32.gmra.mxu0 %v99
    %v1064 = vpop.f32.mrf.mxu0
    %v1065 = vadd.f32 %v904, %v1064
    %1066 = vmatmul.f32.gmra.mxu0 %v105
    %v1067 = vpop.f32.mrf.mxu0
    %v1068 = vadd.f32 %v907, %v1067
    %1069 = vmatmul.f32.gmra.mxu0 %v111
    %v1070 = vpop.f32.mrf.mxu0
    %v1071 = vadd.f32 %v910, %v1070
    %1072 = vmatmul.f32.gmra.mxu0 %v117
    %v1073 = vpop.f32.mrf.mxu0
    %v1074 = vadd.f32 %v913, %v1073
    %1075 = vmatmul.f32.gmra.mxu0 %v123
    %v1076 = vpop.f32.mrf.mxu0
    %v1077 = vadd.f32 %v916, %v1076
    %1078 = vmatmul.f32.gmra.mxu0 %v129
    %v1079 = vpop.f32.mrf.mxu0
    %v1080 = vadd.f32 %v919, %v1079
    %1081 = vmatmul.f32.gmra.mxu0 %v135
    %v1082 = vpop.f32.mrf.mxu0
    %v1083 = vadd.f32 %v922, %v1082
    %1084 = vmatmul.f32.gmra.mxu0 %v141
    %v1085 = vpop.f32.mrf.mxu0
    %v1086 = vadd.f32 %v925, %v1085
    %1087 = vmatmul.f32.gmra.mxu0 %v147
    %v1088 = vpop.f32.mrf.mxu0
    %v1089 = vadd.f32 %v928, %v1088
    %1090 = vmatmul.f32.gmra.mxu0 %v153
    %v1091 = vpop.f32.mrf.mxu0
    %v1092 = vadd.f32 %v931, %v1091
    %1093 = vmatmul.f32.gmra.mxu0 %v159
    %v1094 = vpop.f32.mrf.mxu0
    %v1095 = vadd.f32 %v934, %v1094
    %1096 = vmatmul.f32.gmra.mxu0 %v165
    %v1097 = vpop.f32.mrf.mxu0
    %v1098 = vadd.f32 %v937, %v1097
    %1099 = vmatmul.f32.gmra.mxu0 %v171
    %v1100 = vpop.f32.mrf.mxu0
    %v1101 = vadd.f32 %v940, %v1100
    %1102 = vmatmul.f32.gmra.mxu0 %v177
    %v1103 = vpop.f32.mrf.mxu0
    %v1104 = vadd.f32 %v943, %v1103
    %1105 = vmatmul.f32.gmra.mxu0 %v183
    %v1106 = vpop.f32.mrf.mxu0
    %v1107 = vadd.f32 %v946, %v1106
    %1108 = vmatmul.f32.gmra.mxu0 %v189
    %v1109 = vpop.f32.mrf.mxu0
    %v1110 = vadd.f32 %v949, %v1109
    %1111 = vmatmul.f32.gmra.mxu0 %v195
    %v1112 = vpop.f32.mrf.mxu0
    %v1113 = vadd.f32 %v952, %v1112
    %1114 = vmatmul.f32.gmra.mxu0 %v201
    %v1115 = vpop.f32.mrf.mxu0
    %v1116 = vadd.f32 %v955, %v1115
    %1117 = vmatmul.f32.gmra.mxu0 %v207
    %v1118 = vpop.f32.mrf.mxu0
    %v1119 = vadd.f32 %v958, %v1118
    %1120 = vmatmul.f32.gmra.mxu0 %v213
    %v1121 = vpop.f32.mrf.mxu0
    %v1122 = vadd.f32 %v961, %v1121
    %1123 = vmatmul.f32.gmra.mxu0 %v219
    %v1124 = vpop.f32.mrf.mxu0
    %v1125 = vadd.f32 %v964, %v1124
    %1126 = vmatmul.f32.gmra.mxu0 %v225
    %v1127 = vpop.f32.mrf.mxu0
    %v1128 = vadd.f32 %v967, %v1127
    %1129 = vmatmul.f32.gmra.mxu0 %v231
    %v1130 = vpop.f32.mrf.mxu0
    %v1131 = vadd.f32 %v970, %v1130
    %1132 = vmatmul.f32.gmra.mxu0 %v237
    %v1133 = vpop.f32.mrf.mxu0
    %v1134 = vadd.f32 %v973, %v1133
    %1135 = vmatmul.f32.gmra.mxu0 %v243
    %v1136 = vpop.f32.mrf.mxu0
    %v1137 = vadd.f32 %v976, %v1136
    %1138 = vmatmul.f32.gmra.mxu0 %v249
    %v1139 = vpop.f32.mrf.mxu0
    %v1140 = vadd.f32 %v979, %v1139
    %1141 = vmatmul.f32.gmra.mxu0 %v255
    %v1142 = vpop.f32.mrf.mxu0
    %v1143 = vadd.f32 %v982, %v1142
    %1144 = vmatmul.f32.gmra.mxu0 %v261
    %v1145 = vpop.f32.mrf.mxu0
    %v1146 = vadd.f32 %v985, %v1145
    %1147 = vmatmul.f32.gmra.mxu0 %v267
    %v1148 = vpop.f32.mrf.mxu0
    %v1149 = vadd.f32 %v988, %v1148
    %1150 = vmatmul.f32.gmra.mxu0 %v273
    %v1151 = vpop.f32.mrf.mxu0
    %v1152 = vadd.f32 %v991, %v1151
    %1153 = vmatmul.f32.gmra.mxu0 %v279
    %v1154 = vpop.f32.mrf.mxu0
    %v1155 = vadd.f32 %v994, %v1154
    %1156 = vmatmul.f32.gmra.mxu0 %v285
    %v1157 = vpop.f32.mrf.mxu0
    %v1158 = vadd.f32 %v997, %v1157
    %1159 = vmatmul.f32.gmra.mxu0 %v291
    %v1160 = vpop.f32.mrf.mxu0
    %v1161 = vadd.f32 %v1000, %v1160
    %1162 = vmatmul.f32.gmra.mxu0 %v297
    %v1163 = vpop.f32.mrf.mxu0
    %v1164 = vadd.f32 %v1003, %v1163
    %1165 = vmatmul.f32.gmra.mxu0 %v303
    %v1166 = vpop.f32.mrf.mxu0
    %v1167 = vadd.f32 %v1006, %v1166
    %1168 = vmatmul.f32.gmra.mxu0 %v309
    %v1169 = vpop.f32.mrf.mxu0
    %v1170 = vadd.f32 %v1009, %v1169
    %1171 = vmatmul.f32.gmra.mxu0 %v315
    %v1172 = vpop.f32.mrf.mxu0
    %v1173 = vadd.f32 %v1012, %v1172
    %1174 = vmatmul.f32.gmra.mxu0 %v321
    %v1175 = vpop.f32.mrf.mxu0
    %v1176 = vadd.f32 %v1015, %v1175
    %1177 = vmatmul.f32.gmra.mxu0 %v327
    %v1178 = vpop.f32.mrf.mxu0
    %v1179 = vadd.f32 %v1018, %v1178
    %1180 = vmatmul.f32.gmra.mxu0 %v333
    %v1181 = vpop.f32.mrf.mxu0
    %v1182 = vadd.f32 %v1021, %v1181
    %1183 = vmatmul.f32.gmra.mxu0 %v339
    %v1184 = vpop.f32.mrf.mxu0
    %v1185 = vadd.f32 %v1024, %v1184
    %1186 = vmatmul.f32.gmra.mxu0 %v345
    %v1187 = vpop.f32.mrf.mxu0
    %v1188 = vadd.f32 %v1027, %v1187
    %1189 = vdwg.mxu0
    %1190 = vmatpush.msra.mxu0 %v506
    %1191 = vmatpush.msra.mxu0 %v504
    %1192 = vmatpush.msra.mxu0 %v502
    %1193 = vmatpush.msra.mxu0 %v500
    %1194 = vmatpush.msra.mxu0 %v498
    %1195 = vmatpush.msra.mxu0 %v496
    %1196 = vmatpush.msra.mxu0 %v494
    %1197 = vmatpush.msra.mxu0 %v492
    %1198 = vmatpush.msra.mxu0 %v490
    %1199 = vmatpush.msra.mxu0 %v488
    %1200 = vmatpush.msra.mxu0 %v486
    %1201 = vmatpush.msra.mxu0 %v484
    %1202 = vmatpush.msra.mxu0 %v482
    %1203 = vmatpush.msra.mxu0 %v480
    %1204 = vmatpush.msra.mxu0 %v478
    %1205 = vmatpush.msra.mxu0 %v476
    %1206 = vmatmul.f32.gmra.mxu0 %v64
    %v1207 = vpop.f32.mrf.mxu0
    %v1208 = vadd.f32 %v1047, %v1207
    %1209 = vmatmul.f32.gmra.mxu0 %v70
    %v1210 = vpop.f32.mrf.mxu0
    %v1211 = vadd.f32 %v1050, %v1210
    %1212 = vmatmul.f32.gmra.mxu0 %v76
    %v1213 = vpop.f32.mrf.mxu0
    %v1214 = vadd.f32 %v1053, %v1213
    %1215 = vmatmul.f32.gmra.mxu0 %v82
    %v1216 = vpop.f32.mrf.mxu0
    %v1217 = vadd.f32 %v1056, %v1216
    %1218 = vmatmul.f32.gmra.mxu0 %v88
    %v1219 = vpop.f32.mrf.mxu0
    %v1220 = vadd.f32 %v1059, %v1219
    %1221 = vmatmul.f32.gmra.mxu0 %v94
    %v1222 = vpop.f32.mrf.mxu0
    %v1223 = vadd.f32 %v1062, %v1222
    %1224 = vmatmul.f32.gmra.mxu0 %v100
    %v1225 = vpop.f32.mrf.mxu0
    %v1226 = vadd.f32 %v1065, %v1225
    %1227 = vmatmul.f32.gmra.mxu0 %v106
    %v1228 = vpop.f32.mrf.mxu0
    %v1229 = vadd.f32 %v1068, %v1228
    %1230 = vmatmul.f32.gmra.mxu0 %v112
    %v1231 = vpop.f32.mrf.mxu0
    %v1232 = vadd.f32 %v1071, %v1231
    %1233 = vmatmul.f32.gmra.mxu0 %v118
    %v1234 = vpop.f32.mrf.mxu0
    %v1235 = vadd.f32 %v1074, %v1234
    %1236 = vmatmul.f32.gmra.mxu0 %v124
    %v1237 = vpop.f32.mrf.mxu0
    %v1238 = vadd.f32 %v1077, %v1237
    %1239 = vmatmul.f32.gmra.mxu0 %v130
    %v1240 = vpop.f32.mrf.mxu0
    %v1241 = vadd.f32 %v1080, %v1240
    %1242 = vmatmul.f32.gmra.mxu0 %v136
    %v1243 = vpop.f32.mrf.mxu0
    %v1244 = vadd.f32 %v1083, %v1243
    %1245 = vmatmul.f32.gmra.mxu0 %v142
    %v1246 = vpop.f32.mrf.mxu0
    %v1247 = vadd.f32 %v1086, %v1246
    %1248 = vmatmul.f32.gmra.mxu0 %v148
    %v1249 = vpop.f32.mrf.mxu0
    %v1250 = vadd.f32 %v1089, %v1249
    %1251 = vmatmul.f32.gmra.mxu0 %v154
    %v1252 = vpop.f32.mrf.mxu0
    %v1253 = vadd.f32 %v1092, %v1252
    %1254 = vmatmul.f32.gmra.mxu0 %v160
    %v1255 = vpop.f32.mrf.mxu0
    %v1256 = vadd.f32 %v1095, %v1255
    %1257 = vmatmul.f32.gmra.mxu0 %v166
    %v1258 = vpop.f32.mrf.mxu0
    %v1259 = vadd.f32 %v1098, %v1258
    %1260 = vmatmul.f32.gmra.mxu0 %v172
    %v1261 = vpop.f32.mrf.mxu0
    %v1262 = vadd.f32 %v1101, %v1261
    %1263 = vmatmul.f32.gmra.mxu0 %v178
    %v1264 = vpop.f32.mrf.mxu0
    %v1265 = vadd.f32 %v1104, %v1264
    %1266 = vmatmul.f32.gmra.mxu0 %v184
    %v1267 = vpop.f32.mrf.mxu0
    %v1268 = vadd.f32 %v1107, %v1267
    %1269 = vmatmul.f32.gmra.mxu0 %v190
    %v1270 = vpop.f32.mrf.mxu0
    %v1271 = vadd.f32 %v1110, %v1270
    %1272 = vmatmul.f32.gmra.mxu0 %v196
    %v1273 = vpop.f32.mrf.mxu0
    %v1274 = vadd.f32 %v1113, %v1273
    %1275 = vmatmul.f32.gmra.mxu0 %v202
    %v1276 = vpop.f32.mrf.mxu0
    %v1277 = vadd.f32 %v1116, %v1276
    %1278 = vmatmul.f32.gmra.mxu0 %v208
    %v1279 = vpop.f32.mrf.mxu0
    %v1280 = vadd.f32 %v1119, %v1279
    %1281 = vmatmul.f32.gmra.mxu0 %v214
    %v1282 = vpop.f32.mrf.mxu0
    %v1283 = vadd.f32 %v1122, %v1282
    %1284 = vmatmul.f32.gmra.mxu0 %v220
    %v1285 = vpop.f32.mrf.mxu0
    %v1286 = vadd.f32 %v1125, %v1285
    %1287 = vmatmul.f32.gmra.mxu0 %v226
    %v1288 = vpop.f32.mrf.mxu0
    %v1289 = vadd.f32 %v1128, %v1288
    %1290 = vmatmul.f32.gmra.mxu0 %v232
    %v1291 = vpop.f32.mrf.mxu0
    %v1292 = vadd.f32 %v1131, %v1291
    %1293 = vmatmul.f32.gmra.mxu0 %v238
    %v1294 = vpop.f32.mrf.mxu0
    %v1295 = vadd.f32 %v1134, %v1294
    %1296 = vmatmul.f32.gmra.mxu0 %v244
    %v1297 = vpop.f32.mrf.mxu0
    %v1298 = vadd.f32 %v1137, %v1297
    %1299 = vmatmul.f32.gmra.mxu0 %v250
    %v1300 = vpop.f32.mrf.mxu0
    %v1301 = vadd.f32 %v1140, %v1300
    %1302 = vmatmul.f32.gmra.mxu0 %v256
    %v1303 = vpop.f32.mrf.mxu0
    %v1304 = vadd.f32 %v1143, %v1303
    %1305 = vmatmul.f32.gmra.mxu0 %v262
    %v1306 = vpop.f32.mrf.mxu0
    %v1307 = vadd.f32 %v1146, %v1306
    %1308 = vmatmul.f32.gmra.mxu0 %v268
    %v1309 = vpop.f32.mrf.mxu0
    %v1310 = vadd.f32 %v1149, %v1309
    %1311 = vmatmul.f32.gmra.mxu0 %v274
    %v1312 = vpop.f32.mrf.mxu0
    %v1313 = vadd.f32 %v1152, %v1312
    %1314 = vmatmul.f32.gmra.mxu0 %v280
    %v1315 = vpop.f32.mrf.mxu0
    %v1316 = vadd.f32 %v1155, %v1315
    %1317 = vmatmul.f32.gmra.mxu0 %v286
    %v1318 = vpop.f32.mrf.mxu0
    %v1319 = vadd.f32 %v1158, %v1318
    %1320 = vmatmul.f32.gmra.mxu0 %v292
    %v1321 = vpop.f32.mrf.mxu0
    %v1322 = vadd.f32 %v1161, %v1321
    %1323 = vmatmul.f32.gmra.mxu0 %v298
    %v1324 = vpop.f32.mrf.mxu0
    %v1325 = vadd.f32 %v1164, %v1324
    %1326 = vmatmul.f32.gmra.mxu0 %v304
    %v1327 = vpop.f32.mrf.mxu0
    %v1328 = vadd.f32 %v1167, %v1327
    %1329 = vmatmul.f32.gmra.mxu0 %v310
    %v1330 = vpop.f32.mrf.mxu0
    %v1331 = vadd.f32 %v1170, %v1330
    %1332 = vmatmul.f32.gmra.mxu0 %v316
    %v1333 = vpop.f32.mrf.mxu0
    %v1334 = vadd.f32 %v1173, %v1333
    %1335 = vmatmul.f32.gmra.mxu0 %v322
    %v1336 = vpop.f32.mrf.mxu0
    %v1337 = vadd.f32 %v1176, %v1336
    %1338 = vmatmul.f32.gmra.mxu0 %v328
    %v1339 = vpop.f32.mrf.mxu0
    %v1340 = vadd.f32 %v1179, %v1339
    %1341 = vmatmul.f32.gmra.mxu0 %v334
    %v1342 = vpop.f32.mrf.mxu0
    %v1343 = vadd.f32 %v1182, %v1342
    %1344 = vmatmul.f32.gmra.mxu0 %v340
    %v1345 = vpop.f32.mrf.mxu0
    %v1346 = vadd.f32 %v1185, %v1345
    %1347 = vmatmul.f32.gmra.mxu0 %v346
    %v1348 = vpop.f32.mrf.mxu0
    %v1349 = vadd.f32 %v1188, %v1348
    %1350 = vdwg.mxu0
    %1351 = vmatpush.msra.mxu0 %v538
    %1352 = vmatpush.msra.mxu0 %v536
    %1353 = vmatpush.msra.mxu0 %v534
    %1354 = vmatpush.msra.mxu0 %v532
    %1355 = vmatpush.msra.mxu0 %v530
    %1356 = vmatpush.msra.mxu0 %v528
    %1357 = vmatpush.msra.mxu0 %v526
    %1358 = vmatpush.msra.mxu0 %v524
    %1359 = vmatpush.msra.mxu0 %v522
    %1360 = vmatpush.msra.mxu0 %v520
    %1361 = vmatpush.msra.mxu0 %v518
    %1362 = vmatpush.msra.mxu0 %v516
    %1363 = vmatpush.msra.mxu0 %v514
    %1364 = vmatpush.msra.mxu0 %v512
    %1365 = vmatpush.msra.mxu0 %v510
    %1366 = vmatpush.msra.mxu0 %v508
    %1367 = vmatmul.f32.gmra.mxu0 %v65
    %v1368 = vpop.f32.mrf.mxu0
    %v1369 = vadd.f32 %v1208, %v1368
    %1370 = vmatmul.f32.gmra.mxu0 %v71
    %v1371 = vpop.f32.mrf.mxu0
    %v1372 = vadd.f32 %v1211, %v1371
    %1373 = vmatmul.f32.gmra.mxu0 %v77
    %v1374 = vpop.f32.mrf.mxu0
    %v1375 = vadd.f32 %v1214, %v1374
    %1376 = vmatmul.f32.gmra.mxu0 %v83
    %v1377 = vpop.f32.mrf.mxu0
    %v1378 = vadd.f32 %v1217, %v1377
    %1379 = vmatmul.f32.gmra.mxu0 %v89
    %v1380 = vpop.f32.mrf.mxu0
    %v1381 = vadd.f32 %v1220, %v1380
    %1382 = vmatmul.f32.gmra.mxu0 %v95
    %v1383 = vpop.f32.mrf.mxu0
    %v1384 = vadd.f32 %v1223, %v1383
    %1385 = vmatmul.f32.gmra.mxu0 %v101
    %v1386 = vpop.f32.mrf.mxu0
    %v1387 = vadd.f32 %v1226, %v1386
    %1388 = vmatmul.f32.gmra.mxu0 %v107
    %v1389 = vpop.f32.mrf.mxu0
    %v1390 = vadd.f32 %v1229, %v1389
    %1391 = vmatmul.f32.gmra.mxu0 %v113
    %v1392 = vpop.f32.mrf.mxu0
    %v1393 = vadd.f32 %v1232, %v1392
    %1394 = vmatmul.f32.gmra.mxu0 %v119
    %v1395 = vpop.f32.mrf.mxu0
    %v1396 = vadd.f32 %v1235, %v1395
    %1397 = vmatmul.f32.gmra.mxu0 %v125
    %v1398 = vpop.f32.mrf.mxu0
    %v1399 = vadd.f32 %v1238, %v1398
    %1400 = vmatmul.f32.gmra.mxu0 %v131
    %v1401 = vpop.f32.mrf.mxu0
    %v1402 = vadd.f32 %v1241, %v1401
    %1403 = vmatmul.f32.gmra.mxu0 %v137
    %v1404 = vpop.f32.mrf.mxu0
    %v1405 = vadd.f32 %v1244, %v1404
    %1406 = vmatmul.f32.gmra.mxu0 %v143
    %v1407 = vpop.f32.mrf.mxu0
    %v1408 = vadd.f32 %v1247, %v1407
    %1409 = vmatmul.f32.gmra.mxu0 %v149
    %v1410 = vpop.f32.mrf.mxu0
    %v1411 = vadd.f32 %v1250, %v1410
    %1412 = vmatmul.f32.gmra.mxu0 %v155
    %v1413 = vpop.f32.mrf.mxu0
    %v1414 = vadd.f32 %v1253, %v1413
    %1415 = vmatmul.f32.gmra.mxu0 %v161
    %v1416 = vpop.f32.mrf.mxu0
    %v1417 = vadd.f32 %v1256, %v1416
    %1418 = vmatmul.f32.gmra.mxu0 %v167
    %v1419 = vpop.f32.mrf.mxu0
    %v1420 = vadd.f32 %v1259, %v1419
    %1421 = vmatmul.f32.gmra.mxu0 %v173
    %v1422 = vpop.f32.mrf.mxu0
    %v1423 = vadd.f32 %v1262, %v1422
    %1424 = vmatmul.f32.gmra.mxu0 %v179
    %v1425 = vpop.f32.mrf.mxu0
    %v1426 = vadd.f32 %v1265, %v1425
    %1427 = vmatmul.f32.gmra.mxu0 %v185
    %v1428 = vpop.f32.mrf.mxu0
    %v1429 = vadd.f32 %v1268, %v1428
    %1430 = vmatmul.f32.gmra.mxu0 %v191
    %v1431 = vpop.f32.mrf.mxu0
    %v1432 = vadd.f32 %v1271, %v1431
    %1433 = vmatmul.f32.gmra.mxu0 %v197
    %v1434 = vpop.f32.mrf.mxu0
    %v1435 = vadd.f32 %v1274, %v1434
    %1436 = vmatmul.f32.gmra.mxu0 %v203
    %v1437 = vpop.f32.mrf.mxu0
    %v1438 = vadd.f32 %v1277, %v1437
    %1439 = vmatmul.f32.gmra.mxu0 %v209
    %v1440 = vpop.f32.mrf.mxu0
    %v1441 = vadd.f32 %v1280, %v1440
    %1442 = vmatmul.f32.gmra.mxu0 %v215
    %v1443 = vpop.f32.mrf.mxu0
    %v1444 = vadd.f32 %v1283, %v1443
    %1445 = vmatmul.f32.gmra.mxu0 %v221
    %v1446 = vpop.f32.mrf.mxu0
    %v1447 = vadd.f32 %v1286, %v1446
    %1448 = vmatmul.f32.gmra.mxu0 %v227
    %v1449 = vpop.f32.mrf.mxu0
    %v1450 = vadd.f32 %v1289, %v1449
    %1451 = vmatmul.f32.gmra.mxu0 %v233
    %v1452 = vpop.f32.mrf.mxu0
    %v1453 = vadd.f32 %v1292, %v1452
    %1454 = vmatmul.f32.gmra.mxu0 %v239
    %v1455 = vpop.f32.mrf.mxu0
    %v1456 = vadd.f32 %v1295, %v1455
    %1457 = vmatmul.f32.gmra.mxu0 %v245
    %v1458 = vpop.f32.mrf.mxu0
    %v1459 = vadd.f32 %v1298, %v1458
    %1460 = vmatmul.f32.gmra.mxu0 %v251
    %v1461 = vpop.f32.mrf.mxu0
    %v1462 = vadd.f32 %v1301, %v1461
    %1463 = vmatmul.f32.gmra.mxu0 %v257
    %v1464 = vpop.f32.mrf.mxu0
    %v1465 = vadd.f32 %v1304, %v1464
    %1466 = vmatmul.f32.gmra.mxu0 %v263
    %v1467 = vpop.f32.mrf.mxu0
    %v1468 = vadd.f32 %v1307, %v1467
    %1469 = vmatmul.f32.gmra.mxu0 %v269
    %v1470 = vpop.f32.mrf.mxu0
    %v1471 = vadd.f32 %v1310, %v1470
    %1472 = vmatmul.f32.gmra.mxu0 %v275
    %v1473 = vpop.f32.mrf.mxu0
    %v1474 = vadd.f32 %v1313, %v1473
    %1475 = vmatmul.f32.gmra.mxu0 %v281
    %v1476 = vpop.f32.mrf.mxu0
    %v1477 = vadd.f32 %v1316, %v1476
    %1478 = vmatmul.f32.gmra.mxu0 %v287
    %v1479 = vpop.f32.mrf.mxu0
    %v1480 = vadd.f32 %v1319, %v1479
    %1481 = vmatmul.f32.gmra.mxu0 %v293
    %v1482 = vpop.f32.mrf.mxu0
    %v1483 = vadd.f32 %v1322, %v1482
    %1484 = vmatmul.f32.gmra.mxu0 %v299
    %v1485 = vpop.f32.mrf.mxu0
    %v1486 = vadd.f32 %v1325, %v1485
    %1487 = vmatmul.f32.gmra.mxu0 %v305
    %v1488 = vpop.f32.mrf.mxu0
    %v1489 = vadd.f32 %v1328, %v1488
    %1490 = vmatmul.f32.gmra.mxu0 %v311
    %v1491 = vpop.f32.mrf.mxu0
    %v1492 = vadd.f32 %v1331, %v1491
    %1493 = vmatmul.f32.gmra.mxu0 %v317
    %v1494 = vpop.f32.mrf.mxu0
    %v1495 = vadd.f32 %v1334, %v1494
    %1496 = vmatmul.f32.gmra.mxu0 %v323
    %v1497 = vpop.f32.mrf.mxu0
    %v1498 = vadd.f32 %v1337, %v1497
    %1499 = vmatmul.f32.gmra.mxu0 %v329
    %v1500 = vpop.f32.mrf.mxu0
    %v1501 = vadd.f32 %v1340, %v1500
    %1502 = vmatmul.f32.gmra.mxu0 %v335
    %v1503 = vpop.f32.mrf.mxu0
    %v1504 = vadd.f32 %v1343, %v1503
    %1505 = vmatmul.f32.gmra.mxu0 %v341
    %v1506 = vpop.f32.mrf.mxu0
    %v1507 = vadd.f32 %v1346, %v1506
    %1508 = vmatmul.f32.gmra.mxu0 %v347
    %v1509 = vpop.f32.mrf.mxu0
    %v1510 = vadd.f32 %v1349, %v1509
    %1511 = vdwg.mxu0
    %1512 = vmatpush.msra.mxu0 %v379
    %1513 = vmatpush.msra.mxu0 %v377
    %1514 = vmatpush.msra.mxu0 %v375
    %1515 = vmatpush.msra.mxu0 %v373
    %1516 = vmatpush.msra.mxu0 %v371
    %1517 = vmatpush.msra.mxu0 %v369
    %1518 = vmatpush.msra.mxu0 %v367
    %1519 = vmatpush.msra.mxu0 %v365
    %1520 = vmatpush.msra.mxu0 %v363
    %1521 = vmatpush.msra.mxu0 %v361
    %1522 = vmatpush.msra.mxu0 %v359
    %1523 = vmatpush.msra.mxu0 %v357
    %1524 = vmatpush.msra.mxu0 %v355
    %1525 = vmatpush.msra.mxu0 %v353
    %1526 = vmatpush.msra.mxu0 %v351
    %1527 = vmatpush.msra.mxu0 %v349
    %1528 = vmatmul.f32.gmra.mxu0 %v60
    %v1529 = vpop.f32.mrf.mxu0
    %v1530 = vadd.f32 %v543, %v1529
    %1531 = vmatmul.f32.gmra.mxu0 %v66
    %v1532 = vpop.f32.mrf.mxu0
    %v1533 = vadd.f32 %v543, %v1532
    %1534 = vmatmul.f32.gmra.mxu0 %v72
    %v1535 = vpop.f32.mrf.mxu0
    %v1536 = vadd.f32 %v543, %v1535
    %1537 = vmatmul.f32.gmra.mxu0 %v78
    %v1538 = vpop.f32.mrf.mxu0
    %v1539 = vadd.f32 %v543, %v1538
    %1540 = vmatmul.f32.gmra.mxu0 %v84
    %v1541 = vpop.f32.mrf.mxu0
    %v1542 = vadd.f32 %v543, %v1541
    %1543 = vmatmul.f32.gmra.mxu0 %v90
    %v1544 = vpop.f32.mrf.mxu0
    %v1545 = vadd.f32 %v543, %v1544
    %1546 = vmatmul.f32.gmra.mxu0 %v96
    %v1547 = vpop.f32.mrf.mxu0
    %v1548 = vadd.f32 %v543, %v1547
    %1549 = vmatmul.f32.gmra.mxu0 %v102
    %v1550 = vpop.f32.mrf.mxu0
    %v1551 = vadd.f32 %v543, %v1550
    %1552 = vmatmul.f32.gmra.mxu0 %v108
    %v1553 = vpop.f32.mrf.mxu0
    %v1554 = vadd.f32 %v543, %v1553
    %1555 = vmatmul.f32.gmra.mxu0 %v114
    %v1556 = vpop.f32.mrf.mxu0
    %v1557 = vadd.f32 %v543, %v1556
    %1558 = vmatmul.f32.gmra.mxu0 %v120
    %v1559 = vpop.f32.mrf.mxu0
    %v1560 = vadd.f32 %v543, %v1559
    %1561 = vmatmul.f32.gmra.mxu0 %v126
    %v1562 = vpop.f32.mrf.mxu0
    %v1563 = vadd.f32 %v543, %v1562
    %1564 = vmatmul.f32.gmra.mxu0 %v132
    %v1565 = vpop.f32.mrf.mxu0
    %v1566 = vadd.f32 %v543, %v1565
    %1567 = vmatmul.f32.gmra.mxu0 %v138
    %v1568 = vpop.f32.mrf.mxu0
    %v1569 = vadd.f32 %v543, %v1568
    %1570 = vmatmul.f32.gmra.mxu0 %v144
    %v1571 = vpop.f32.mrf.mxu0
    %v1572 = vadd.f32 %v543, %v1571
    %1573 = vmatmul.f32.gmra.mxu0 %v150
    %v1574 = vpop.f32.mrf.mxu0
    %v1575 = vadd.f32 %v543, %v1574
    %1576 = vmatmul.f32.gmra.mxu0 %v156
    %v1577 = vpop.f32.mrf.mxu0
    %v1578 = vadd.f32 %v543, %v1577
    %1579 = vmatmul.f32.gmra.mxu0 %v162
    %v1580 = vpop.f32.mrf.mxu0
    %v1581 = vadd.f32 %v543, %v1580
    %1582 = vmatmul.f32.gmra.mxu0 %v168
    %v1583 = vpop.f32.mrf.mxu0
    %v1584 = vadd.f32 %v543, %v1583
    %1585 = vmatmul.f32.gmra.mxu0 %v174
    %v1586 = vpop.f32.mrf.mxu0
    %v1587 = vadd.f32 %v543, %v1586
    %1588 = vmatmul.f32.gmra.mxu0 %v180
    %v1589 = vpop.f32.mrf.mxu0
    %v1590 = vadd.f32 %v543, %v1589
    %1591 = vmatmul.f32.gmra.mxu0 %v186
    %v1592 = vpop.f32.mrf.mxu0
    %v1593 = vadd.f32 %v543, %v1592
    %1594 = vmatmul.f32.gmra.mxu0 %v192
    %v1595 = vpop.f32.mrf.mxu0
    %v1596 = vadd.f32 %v543, %v1595
    %1597 = vmatmul.f32.gmra.mxu0 %v198
    %v1598 = vpop.f32.mrf.mxu0
    %v1599 = vadd.f32 %v543, %v1598
    %1600 = vmatmul.f32.gmra.mxu0 %v204
    %v1601 = vpop.f32.mrf.mxu0
    %v1602 = vadd.f32 %v543, %v1601
    %1603 = vmatmul.f32.gmra.mxu0 %v210
    %v1604 = vpop.f32.mrf.mxu0
    %v1605 = vadd.f32 %v543, %v1604
    %1606 = vmatmul.f32.gmra.mxu0 %v216
    %v1607 = vpop.f32.mrf.mxu0
    %v1608 = vadd.f32 %v543, %v1607
    %1609 = vmatmul.f32.gmra.mxu0 %v222
    %v1610 = vpop.f32.mrf.mxu0
    %v1611 = vadd.f32 %v543, %v1610
    %1612 = vmatmul.f32.gmra.mxu0 %v228
    %v1613 = vpop.f32.mrf.mxu0
    %v1614 = vadd.f32 %v543, %v1613
    %1615 = vmatmul.f32.gmra.mxu0 %v234
    %v1616 = vpop.f32.mrf.mxu0
    %v1617 = vadd.f32 %v543, %v1616
    %1618 = vmatmul.f32.gmra.mxu0 %v240
    %v1619 = vpop.f32.mrf.mxu0
    %v1620 = vadd.f32 %v543, %v1619
    %1621 = vmatmul.f32.gmra.mxu0 %v246
    %v1622 = vpop.f32.mrf.mxu0
    %v1623 = vadd.f32 %v543, %v1622
    %1624 = vmatmul.f32.gmra.mxu0 %v252
    %v1625 = vpop.f32.mrf.mxu0
    %v1626 = vadd.f32 %v543, %v1625
    %1627 = vmatmul.f32.gmra.mxu0 %v258
    %v1628 = vpop.f32.mrf.mxu0
    %v1629 = vadd.f32 %v543, %v1628
    %1630 = vmatmul.f32.gmra.mxu0 %v264
    %v1631 = vpop.f32.mrf.mxu0
    %v1632 = vadd.f32 %v543, %v1631
    %1633 = vmatmul.f32.gmra.mxu0 %v270
    %v1634 = vpop.f32.mrf.mxu0
    %v1635 = vadd.f32 %v543, %v1634
    %1636 = vmatmul.f32.gmra.mxu0 %v276
    %v1637 = vpop.f32.mrf.mxu0
    %v1638 = vadd.f32 %v543, %v1637
    %1639 = vmatmul.f32.gmra.mxu0 %v282
    %v1640 = vpop.f32.mrf.mxu0
    %v1641 = vadd.f32 %v543, %v1640
    %1642 = vmatmul.f32.gmra.mxu0 %v288
    %v1643 = vpop.f32.mrf.mxu0
    %v1644 = vadd.f32 %v543, %v1643
    %1645 = vmatmul.f32.gmra.mxu0 %v294
    %v1646 = vpop.f32.mrf.mxu0
    %v1647 = vadd.f32 %v543, %v1646
    %1648 = vmatmul.f32.gmra.mxu0 %v300
    %v1649 = vpop.f32.mrf.mxu0
    %v1650 = vadd.f32 %v543, %v1649
    %1651 = vmatmul.f32.gmra.mxu0 %v306
    %v1652 = vpop.f32.mrf.mxu0
    %v1653 = vadd.f32 %v543, %v1652
    %1654 = vmatmul.f32.gmra.mxu0 %v312
    %v1655 = vpop.f32.mrf.mxu0
    %v1656 = vadd.f32 %v543, %v1655
    %1657 = vmatmul.f32.gmra.mxu0 %v318
    %v1658 = vpop.f32.mrf.mxu0
    %v1659 = vadd.f32 %v543, %v1658
    %1660 = vmatmul.f32.gmra.mxu0 %v324
    %v1661 = vpop.f32.mrf.mxu0
    %v1662 = vadd.f32 %v543, %v1661
    %1663 = vmatmul.f32.gmra.mxu0 %v330
    %v1664 = vpop.f32.mrf.mxu0
    %v1665 = vadd.f32 %v543, %v1664
    %1666 = vmatmul.f32.gmra.mxu0 %v336
    %v1667 = vpop.f32.mrf.mxu0
    %v1668 = vadd.f32 %v543, %v1667
    %1669 = vmatmul.f32.gmra.mxu0 %v342
    %v1670 = vpop.f32.mrf.mxu0
    %v1671 = vadd.f32 %v543, %v1670
    %1672 = vdwg.mxu0
    %1673 = vmatpush.msra.mxu0 %v411
    %1674 = vmatpush.msra.mxu0 %v409
    %1675 = vmatpush.msra.mxu0 %v407
    %1676 = vmatpush.msra.mxu0 %v405
    %1677 = vmatpush.msra.mxu0 %v403
    %1678 = vmatpush.msra.mxu0 %v401
    %1679 = vmatpush.msra.mxu0 %v399
    %1680 = vmatpush.msra.mxu0 %v397
    %1681 = vmatpush.msra.mxu0 %v395
    %1682 = vmatpush.msra.mxu0 %v393
    %1683 = vmatpush.msra.mxu0 %v391
    %1684 = vmatpush.msra.mxu0 %v389
    %1685 = vmatpush.msra.mxu0 %v387
    %1686 = vmatpush.msra.mxu0 %v385
    %1687 = vmatpush.msra.mxu0 %v383
    %1688 = vmatpush.msra.mxu0 %v381
    %1689 = vmatmul.f32.gmra.mxu0 %v61
    %v1690 = vpop.f32.mrf.mxu0
    %v1691 = vadd.f32 %v1530, %v1690
    %1692 = vmatmul.f32.gmra.mxu0 %v67
    %v1693 = vpop.f32.mrf.mxu0
    %v1694 = vadd.f32 %v1533, %v1693
    %1695 = vmatmul.f32.gmra.mxu0 %v73
    %v1696 = vpop.f32.mrf.mxu0
    %v1697 = vadd.f32 %v1536, %v1696
    %1698 = vmatmul.f32.gmra.mxu0 %v79
    %v1699 = vpop.f32.mrf.mxu0
    %v1700 = vadd.f32 %v1539, %v1699
    %1701 = vmatmul.f32.gmra.mxu0 %v85
    %v1702 = vpop.f32.mrf.mxu0
    %v1703 = vadd.f32 %v1542, %v1702
    %1704 = vmatmul.f32.gmra.mxu0 %v91
    %v1705 = vpop.f32.mrf.mxu0
    %v1706 = vadd.f32 %v1545, %v1705
    %1707 = vmatmul.f32.gmra.mxu0 %v97
    %v1708 = vpop.f32.mrf.mxu0
    %v1709 = vadd.f32 %v1548, %v1708
    %1710 = vmatmul.f32.gmra.mxu0 %v103
    %v1711 = vpop.f32.mrf.mxu0
    %v1712 = vadd.f32 %v1551, %v1711
    %1713 = vmatmul.f32.gmra.mxu0 %v109
    %v1714 = vpop.f32.mrf.mxu0
    %v1715 = vadd.f32 %v1554, %v1714
    %1716 = vmatmul.f32.gmra.mxu0 %v115
    %v1717 = vpop.f32.mrf.mxu0
    %v1718 = vadd.f32 %v1557, %v1717
    %1719 = vmatmul.f32.gmra.mxu0 %v121
    %v1720 = vpop.f32.mrf.mxu0
    %v1721 = vadd.f32 %v1560, %v1720
    %1722 = vmatmul.f32.gmra.mxu0 %v127
    %v1723 = vpop.f32.mrf.mxu0
    %v1724 = vadd.f32 %v1563, %v1723
    %1725 = vmatmul.f32.gmra.mxu0 %v133
    %v1726 = vpop.f32.mrf.mxu0
    %v1727 = vadd.f32 %v1566, %v1726
    %1728 = vmatmul.f32.gmra.mxu0 %v139
    %v1729 = vpop.f32.mrf.mxu0
    %v1730 = vadd.f32 %v1569, %v1729
    %1731 = vmatmul.f32.gmra.mxu0 %v145
    %v1732 = vpop.f32.mrf.mxu0
    %v1733 = vadd.f32 %v1572, %v1732
    %1734 = vmatmul.f32.gmra.mxu0 %v151
    %v1735 = vpop.f32.mrf.mxu0
    %v1736 = vadd.f32 %v1575, %v1735
    %1737 = vmatmul.f32.gmra.mxu0 %v157
    %v1738 = vpop.f32.mrf.mxu0
    %v1739 = vadd.f32 %v1578, %v1738
    %1740 = vmatmul.f32.gmra.mxu0 %v163
    %v1741 = vpop.f32.mrf.mxu0
    %v1742 = vadd.f32 %v1581, %v1741
    %1743 = vmatmul.f32.gmra.mxu0 %v169
    %v1744 = vpop.f32.mrf.mxu0
    %v1745 = vadd.f32 %v1584, %v1744
    %1746 = vmatmul.f32.gmra.mxu0 %v175
    %v1747 = vpop.f32.mrf.mxu0
    %v1748 = vadd.f32 %v1587, %v1747
    %1749 = vmatmul.f32.gmra.mxu0 %v181
    %v1750 = vpop.f32.mrf.mxu0
    %v1751 = vadd.f32 %v1590, %v1750
    %1752 = vmatmul.f32.gmra.mxu0 %v187
    %v1753 = vpop.f32.mrf.mxu0
    %v1754 = vadd.f32 %v1593, %v1753
    %1755 = vmatmul.f32.gmra.mxu0 %v193
    %v1756 = vpop.f32.mrf.mxu0
    %v1757 = vadd.f32 %v1596, %v1756
    %1758 = vmatmul.f32.gmra.mxu0 %v199
    %v1759 = vpop.f32.mrf.mxu0
    %v1760 = vadd.f32 %v1599, %v1759
    %1761 = vmatmul.f32.gmra.mxu0 %v205
    %v1762 = vpop.f32.mrf.mxu0
    %v1763 = vadd.f32 %v1602, %v1762
    %1764 = vmatmul.f32.gmra.mxu0 %v211
    %v1765 = vpop.f32.mrf.mxu0
    %v1766 = vadd.f32 %v1605, %v1765
    %1767 = vmatmul.f32.gmra.mxu0 %v217
    %v1768 = vpop.f32.mrf.mxu0
    %v1769 = vadd.f32 %v1608, %v1768
    %1770 = vmatmul.f32.gmra.mxu0 %v223
    %v1771 = vpop.f32.mrf.mxu0
    %v1772 = vadd.f32 %v1611, %v1771
    %1773 = vmatmul.f32.gmra.mxu0 %v229
    %v1774 = vpop.f32.mrf.mxu0
    %v1775 = vadd.f32 %v1614, %v1774
    %1776 = vmatmul.f32.gmra.mxu0 %v235
    %v1777 = vpop.f32.mrf.mxu0
    %v1778 = vadd.f32 %v1617, %v1777
    %1779 = vmatmul.f32.gmra.mxu0 %v241
    %v1780 = vpop.f32.mrf.mxu0
    %v1781 = vadd.f32 %v1620, %v1780
    %1782 = vmatmul.f32.gmra.mxu0 %v247
    %v1783 = vpop.f32.mrf.mxu0
    %v1784 = vadd.f32 %v1623, %v1783
    %1785 = vmatmul.f32.gmra.mxu0 %v253
    %v1786 = vpop.f32.mrf.mxu0
    %v1787 = vadd.f32 %v1626, %v1786
    %1788 = vmatmul.f32.gmra.mxu0 %v259
    %v1789 = vpop.f32.mrf.mxu0
    %v1790 = vadd.f32 %v1629, %v1789
    %1791 = vmatmul.f32.gmra.mxu0 %v265
    %v1792 = vpop.f32.mrf.mxu0
    %v1793 = vadd.f32 %v1632, %v1792
    %1794 = vmatmul.f32.gmra.mxu0 %v271
    %v1795 = vpop.f32.mrf.mxu0
    %v1796 = vadd.f32 %v1635, %v1795
    %1797 = vmatmul.f32.gmra.mxu0 %v277
    %v1798 = vpop.f32.mrf.mxu0
    %v1799 = vadd.f32 %v1638, %v1798
    %1800 = vmatmul.f32.gmra.mxu0 %v283
    %v1801 = vpop.f32.mrf.mxu0
    %v1802 = vadd.f32 %v1641, %v1801
    %1803 = vmatmul.f32.gmra.mxu0 %v289
    %v1804 = vpop.f32.mrf.mxu0
    %v1805 = vadd.f32 %v1644, %v1804
    %1806 = vmatmul.f32.gmra.mxu0 %v295
    %v1807 = vpop.f32.mrf.mxu0
    %v1808 = vadd.f32 %v1647, %v1807
    %1809 = vmatmul.f32.gmra.mxu0 %v301
    %v1810 = vpop.f32.mrf.mxu0
    %v1811 = vadd.f32 %v1650, %v1810
    %1812 = vmatmul.f32.gmra.mxu0 %v307
    %v1813 = vpop.f32.mrf.mxu0
    %v1814 = vadd.f32 %v1653, %v1813
    %1815 = vmatmul.f32.gmra.mxu0 %v313
    %v1816 = vpop.f32.mrf.mxu0
    %v1817 = vadd.f32 %v1656, %v1816
    %1818 = vmatmul.f32.gmra.mxu0 %v319
    %v1819 = vpop.f32.mrf.mxu0
    %v1820 = vadd.f32 %v1659, %v1819
    %1821 = vmatmul.f32.gmra.mxu0 %v325
    %v1822 = vpop.f32.mrf.mxu0
    %v1823 = vadd.f32 %v1662, %v1822
    %1824 = vmatmul.f32.gmra.mxu0 %v331
    %v1825 = vpop.f32.mrf.mxu0
    %v1826 = vadd.f32 %v1665, %v1825
    %1827 = vmatmul.f32.gmra.mxu0 %v337
    %v1828 = vpop.f32.mrf.mxu0
    %v1829 = vadd.f32 %v1668, %v1828
    %1830 = vmatmul.f32.gmra.mxu0 %v343
    %v1831 = vpop.f32.mrf.mxu0
    %v1832 = vadd.f32 %v1671, %v1831
    %1833 = vdwg.mxu0
    %1834 = vmatpush.msra.mxu0 %v443
    %1835 = vmatpush.msra.mxu0 %v441
    %1836 = vmatpush.msra.mxu0 %v439
    %1837 = vmatpush.msra.mxu0 %v437
    %1838 = vmatpush.msra.mxu0 %v435
    %1839 = vmatpush.msra.mxu0 %v433
    %1840 = vmatpush.msra.mxu0 %v431
    %1841 = vmatpush.msra.mxu0 %v429
    %1842 = vmatpush.msra.mxu0 %v427
    %1843 = vmatpush.msra.mxu0 %v425
    %1844 = vmatpush.msra.mxu0 %v423
    %1845 = vmatpush.msra.mxu0 %v421
    %1846 = vmatpush.msra.mxu0 %v419
    %1847 = vmatpush.msra.mxu0 %v417
    %1848 = vmatpush.msra.mxu0 %v415
    %1849 = vmatpush.msra.mxu0 %v413
    %1850 = vmatmul.f32.gmra.mxu0 %v62
    %v1851 = vpop.f32.mrf.mxu0
    %v1852 = vadd.f32 %v1691, %v1851
    %1853 = vmatmul.f32.gmra.mxu0 %v68
    %v1854 = vpop.f32.mrf.mxu0
    %v1855 = vadd.f32 %v1694, %v1854
    %1856 = vmatmul.f32.gmra.mxu0 %v74
    %v1857 = vpop.f32.mrf.mxu0
    %v1858 = vadd.f32 %v1697, %v1857
    %1859 = vmatmul.f32.gmra.mxu0 %v80
    %v1860 = vpop.f32.mrf.mxu0
    %v1861 = vadd.f32 %v1700, %v1860
    %1862 = vmatmul.f32.gmra.mxu0 %v86
    %v1863 = vpop.f32.mrf.mxu0
    %v1864 = vadd.f32 %v1703, %v1863
    %1865 = vmatmul.f32.gmra.mxu0 %v92
    %v1866 = vpop.f32.mrf.mxu0
    %v1867 = vadd.f32 %v1706, %v1866
    %1868 = vmatmul.f32.gmra.mxu0 %v98
    %v1869 = vpop.f32.mrf.mxu0
    %v1870 = vadd.f32 %v1709, %v1869
    %1871 = vmatmul.f32.gmra.mxu0 %v104
    %v1872 = vpop.f32.mrf.mxu0
    %v1873 = vadd.f32 %v1712, %v1872
    %1874 = vmatmul.f32.gmra.mxu0 %v110
    %v1875 = vpop.f32.mrf.mxu0
    %v1876 = vadd.f32 %v1715, %v1875
    %1877 = vmatmul.f32.gmra.mxu0 %v116
    %v1878 = vpop.f32.mrf.mxu0
    %v1879 = vadd.f32 %v1718, %v1878
    %1880 = vmatmul.f32.gmra.mxu0 %v122
    %v1881 = vpop.f32.mrf.mxu0
    %v1882 = vadd.f32 %v1721, %v1881
    %1883 = vmatmul.f32.gmra.mxu0 %v128
    %v1884 = vpop.f32.mrf.mxu0
    %v1885 = vadd.f32 %v1724, %v1884
    %1886 = vmatmul.f32.gmra.mxu0 %v134
    %v1887 = vpop.f32.mrf.mxu0
    %v1888 = vadd.f32 %v1727, %v1887
    %1889 = vmatmul.f32.gmra.mxu0 %v140
    %v1890 = vpop.f32.mrf.mxu0
    %v1891 = vadd.f32 %v1730, %v1890
    %1892 = vmatmul.f32.gmra.mxu0 %v146
    %v1893 = vpop.f32.mrf.mxu0
    %v1894 = vadd.f32 %v1733, %v1893
    %1895 = vmatmul.f32.gmra.mxu0 %v152
    %v1896 = vpop.f32.mrf.mxu0
    %v1897 = vadd.f32 %v1736, %v1896
    %1898 = vmatmul.f32.gmra.mxu0 %v158
    %v1899 = vpop.f32.mrf.mxu0
    %v1900 = vadd.f32 %v1739, %v1899
    %1901 = vmatmul.f32.gmra.mxu0 %v164
    %v1902 = vpop.f32.mrf.mxu0
    %v1903 = vadd.f32 %v1742, %v1902
    %1904 = vmatmul.f32.gmra.mxu0 %v170
    %v1905 = vpop.f32.mrf.mxu0
    %v1906 = vadd.f32 %v1745, %v1905
    %1907 = vmatmul.f32.gmra.mxu0 %v176
    %v1908 = vpop.f32.mrf.mxu0
    %v1909 = vadd.f32 %v1748, %v1908
    %1910 = vmatmul.f32.gmra.mxu0 %v182
    %v1911 = vpop.f32.mrf.mxu0
    %v1912 = vadd.f32 %v1751, %v1911
    %1913 = vmatmul.f32.gmra.mxu0 %v188
    %v1914 = vpop.f32.mrf.mxu0
    %v1915 = vadd.f32 %v1754, %v1914
    %1916 = vmatmul.f32.gmra.mxu0 %v194
    %v1917 = vpop.f32.mrf.mxu0
    %v1918 = vadd.f32 %v1757, %v1917
    %1919 = vmatmul.f32.gmra.mxu0 %v200
    %v1920 = vpop.f32.mrf.mxu0
    %v1921 = vadd.f32 %v1760, %v1920
    %1922 = vmatmul.f32.gmra.mxu0 %v206
    %v1923 = vpop.f32.mrf.mxu0
    %v1924 = vadd.f32 %v1763, %v1923
    %1925 = vmatmul.f32.gmra.mxu0 %v212
    %v1926 = vpop.f32.mrf.mxu0
    %v1927 = vadd.f32 %v1766, %v1926
    %1928 = vmatmul.f32.gmra.mxu0 %v218
    %v1929 = vpop.f32.mrf.mxu0
    %v1930 = vadd.f32 %v1769, %v1929
    %1931 = vmatmul.f32.gmra.mxu0 %v224
    %v1932 = vpop.f32.mrf.mxu0
    %v1933 = vadd.f32 %v1772, %v1932
    %1934 = vmatmul.f32.gmra.mxu0 %v230
    %v1935 = vpop.f32.mrf.mxu0
    %v1936 = vadd.f32 %v1775, %v1935
    %1937 = vmatmul.f32.gmra.mxu0 %v236
    %v1938 = vpop.f32.mrf.mxu0
    %v1939 = vadd.f32 %v1778, %v1938
    %1940 = vmatmul.f32.gmra.mxu0 %v242
    %v1941 = vpop.f32.mrf.mxu0
    %v1942 = vadd.f32 %v1781, %v1941
    %1943 = vmatmul.f32.gmra.mxu0 %v248
    %v1944 = vpop.f32.mrf.mxu0
    %v1945 = vadd.f32 %v1784, %v1944
    %1946 = vmatmul.f32.gmra.mxu0 %v254
    %v1947 = vpop.f32.mrf.mxu0
    %v1948 = vadd.f32 %v1787, %v1947
    %1949 = vmatmul.f32.gmra.mxu0 %v260
    %v1950 = vpop.f32.mrf.mxu0
    %v1951 = vadd.f32 %v1790, %v1950
    %1952 = vmatmul.f32.gmra.mxu0 %v266
    %v1953 = vpop.f32.mrf.mxu0
    %v1954 = vadd.f32 %v1793, %v1953
    %1955 = vmatmul.f32.gmra.mxu0 %v272
    %v1956 = vpop.f32.mrf.mxu0
    %v1957 = vadd.f32 %v1796, %v1956
    %1958 = vmatmul.f32.gmra.mxu0 %v278
    %v1959 = vpop.f32.mrf.mxu0
    %v1960 = vadd.f32 %v1799, %v1959
    %1961 = vmatmul.f32.gmra.mxu0 %v284
    %v1962 = vpop.f32.mrf.mxu0
    %v1963 = vadd.f32 %v1802, %v1962
    %1964 = vmatmul.f32.gmra.mxu0 %v290
    %v1965 = vpop.f32.mrf.mxu0
    %v1966 = vadd.f32 %v1805, %v1965
    %1967 = vmatmul.f32.gmra.mxu0 %v296
    %v1968 = vpop.f32.mrf.mxu0
    %v1969 = vadd.f32 %v1808, %v1968
    %1970 = vmatmul.f32.gmra.mxu0 %v302
    %v1971 = vpop.f32.mrf.mxu0
    %v1972 = vadd.f32 %v1811, %v1971
    %1973 = vmatmul.f32.gmra.mxu0 %v308
    %v1974 = vpop.f32.mrf.mxu0
    %v1975 = vadd.f32 %v1814, %v1974
    %1976 = vmatmul.f32.gmra.mxu0 %v314
    %v1977 = vpop.f32.mrf.mxu0
    %v1978 = vadd.f32 %v1817, %v1977
    %1979 = vmatmul.f32.gmra.mxu0 %v320
    %v1980 = vpop.f32.mrf.mxu0
    %v1981 = vadd.f32 %v1820, %v1980
    %1982 = vmatmul.f32.gmra.mxu0 %v326
    %v1983 = vpop.f32.mrf.mxu0
    %v1984 = vadd.f32 %v1823, %v1983
    %1985 = vmatmul.f32.gmra.mxu0 %v332
    %v1986 = vpop.f32.mrf.mxu0
    %v1987 = vadd.f32 %v1826, %v1986
    %1988 = vmatmul.f32.gmra.mxu0 %v338
    %v1989 = vpop.f32.mrf.mxu0
    %v1990 = vadd.f32 %v1829, %v1989
    %1991 = vmatmul.f32.gmra.mxu0 %v344
    %v1992 = vpop.f32.mrf.mxu0
    %v1993 = vadd.f32 %v1832, %v1992
    %1994 = vdwg.mxu0
    %1995 = vmatpush.msra.mxu0 %v475
    %1996 = vmatpush.msra.mxu0 %v473
    %1997 = vmatpush.msra.mxu0 %v471
    %1998 = vmatpush.msra.mxu0 %v469
    %1999 = vmatpush.msra.mxu0 %v467
    %2000 = vmatpush.msra.mxu0 %v465
    %2001 = vmatpush.msra.mxu0 %v463
    %2002 = vmatpush.msra.mxu0 %v461
    %2003 = vmatpush.msra.mxu0 %v459
    %2004 = vmatpush.msra.mxu0 %v457
    %2005 = vmatpush.msra.mxu0 %v455
    %2006 = vmatpush.msra.mxu0 %v453
    %2007 = vmatpush.msra.mxu0 %v451
    %2008 = vmatpush.msra.mxu0 %v449
    %2009 = vmatpush.msra.mxu0 %v447
    %2010 = vmatpush.msra.mxu0 %v445
    %2011 = vmatmul.f32.gmra.mxu0 %v63
    %v2012 = vpop.f32.mrf.mxu0
    %v2013 = vadd.f32 %v1852, %v2012
    %2014 = vmatmul.f32.gmra.mxu0 %v69
    %v2015 = vpop.f32.mrf.mxu0
    %v2016 = vadd.f32 %v1855, %v2015
    %2017 = vmatmul.f32.gmra.mxu0 %v75
    %v2018 = vpop.f32.mrf.mxu0
    %v2019 = vadd.f32 %v1858, %v2018
    %2020 = vmatmul.f32.gmra.mxu0 %v81
    %v2021 = vpop.f32.mrf.mxu0
    %v2022 = vadd.f32 %v1861, %v2021
    %2023 = vmatmul.f32.gmra.mxu0 %v87
    %v2024 = vpop.f32.mrf.mxu0
    %v2025 = vadd.f32 %v1864, %v2024
    %2026 = vmatmul.f32.gmra.mxu0 %v93
    %v2027 = vpop.f32.mrf.mxu0
    %v2028 = vadd.f32 %v1867, %v2027
    %2029 = vmatmul.f32.gmra.mxu0 %v99
    %v2030 = vpop.f32.mrf.mxu0
    %v2031 = vadd.f32 %v1870, %v2030
    %2032 = vmatmul.f32.gmra.mxu0 %v105
    %v2033 = vpop.f32.mrf.mxu0
    %v2034 = vadd.f32 %v1873, %v2033
    %2035 = vmatmul.f32.gmra.mxu0 %v111
    %v2036 = vpop.f32.mrf.mxu0
    %v2037 = vadd.f32 %v1876, %v2036
    %2038 = vmatmul.f32.gmra.mxu0 %v117
    %v2039 = vpop.f32.mrf.mxu0
    %v2040 = vadd.f32 %v1879, %v2039
    %2041 = vmatmul.f32.gmra.mxu0 %v123
    %v2042 = vpop.f32.mrf.mxu0
    %v2043 = vadd.f32 %v1882, %v2042
    %2044 = vmatmul.f32.gmra.mxu0 %v129
    %v2045 = vpop.f32.mrf.mxu0
    %v2046 = vadd.f32 %v1885, %v2045
    %2047 = vmatmul.f32.gmra.mxu0 %v135
    %v2048 = vpop.f32.mrf.mxu0
    %v2049 = vadd.f32 %v1888, %v2048
    %2050 = vmatmul.f32.gmra.mxu0 %v141
    %v2051 = vpop.f32.mrf.mxu0
    %v2052 = vadd.f32 %v1891, %v2051
    %2053 = vmatmul.f32.gmra.mxu0 %v147
    %v2054 = vpop.f32.mrf.mxu0
    %v2055 = vadd.f32 %v1894, %v2054
    %2056 = vmatmul.f32.gmra.mxu0 %v153
    %v2057 = vpop.f32.mrf.mxu0
    %v2058 = vadd.f32 %v1897, %v2057
    %2059 = vmatmul.f32.gmra.mxu0 %v159
    %v2060 = vpop.f32.mrf.mxu0
    %v2061 = vadd.f32 %v1900, %v2060
    %2062 = vmatmul.f32.gmra.mxu0 %v165
    %v2063 = vpop.f32.mrf.mxu0
    %v2064 = vadd.f32 %v1903, %v2063
    %2065 = vmatmul.f32.gmra.mxu0 %v171
    %v2066 = vpop.f32.mrf.mxu0
    %v2067 = vadd.f32 %v1906, %v2066
    %2068 = vmatmul.f32.gmra.mxu0 %v177
    %v2069 = vpop.f32.mrf.mxu0
    %v2070 = vadd.f32 %v1909, %v2069
    %2071 = vmatmul.f32.gmra.mxu0 %v183
    %v2072 = vpop.f32.mrf.mxu0
    %v2073 = vadd.f32 %v1912, %v2072
    %2074 = vmatmul.f32.gmra.mxu0 %v189
    %v2075 = vpop.f32.mrf.mxu0
    %v2076 = vadd.f32 %v1915, %v2075
    %2077 = vmatmul.f32.gmra.mxu0 %v195
    %v2078 = vpop.f32.mrf.mxu0
    %v2079 = vadd.f32 %v1918, %v2078
    %2080 = vmatmul.f32.gmra.mxu0 %v201
    %v2081 = vpop.f32.mrf.mxu0
    %v2082 = vadd.f32 %v1921, %v2081
    %2083 = vmatmul.f32.gmra.mxu0 %v207
    %v2084 = vpop.f32.mrf.mxu0
    %v2085 = vadd.f32 %v1924, %v2084
    %2086 = vmatmul.f32.gmra.mxu0 %v213
    %v2087 = vpop.f32.mrf.mxu0
    %v2088 = vadd.f32 %v1927, %v2087
    %2089 = vmatmul.f32.gmra.mxu0 %v219
    %v2090 = vpop.f32.mrf.mxu0
    %v2091 = vadd.f32 %v1930, %v2090
    %2092 = vmatmul.f32.gmra.mxu0 %v225
    %v2093 = vpop.f32.mrf.mxu0
    %v2094 = vadd.f32 %v1933, %v2093
    %2095 = vmatmul.f32.gmra.mxu0 %v231
    %v2096 = vpop.f32.mrf.mxu0
    %v2097 = vadd.f32 %v1936, %v2096
    %2098 = vmatmul.f32.gmra.mxu0 %v237
    %v2099 = vpop.f32.mrf.mxu0
    %v2100 = vadd.f32 %v1939, %v2099
    %2101 = vmatmul.f32.gmra.mxu0 %v243
    %v2102 = vpop.f32.mrf.mxu0
    %v2103 = vadd.f32 %v1942, %v2102
    %2104 = vmatmul.f32.gmra.mxu0 %v249
    %v2105 = vpop.f32.mrf.mxu0
    %v2106 = vadd.f32 %v1945, %v2105
    %2107 = vmatmul.f32.gmra.mxu0 %v255
    %v2108 = vpop.f32.mrf.mxu0
    %v2109 = vadd.f32 %v1948, %v2108
    %2110 = vmatmul.f32.gmra.mxu0 %v261
    %v2111 = vpop.f32.mrf.mxu0
    %v2112 = vadd.f32 %v1951, %v2111
    %2113 = vmatmul.f32.gmra.mxu0 %v267
    %v2114 = vpop.f32.mrf.mxu0
    %v2115 = vadd.f32 %v1954, %v2114
    %2116 = vmatmul.f32.gmra.mxu0 %v273
    %v2117 = vpop.f32.mrf.mxu0
    %v2118 = vadd.f32 %v1957, %v2117
    %2119 = vmatmul.f32.gmra.mxu0 %v279
    %v2120 = vpop.f32.mrf.mxu0
    %v2121 = vadd.f32 %v1960, %v2120
    %2122 = vmatmul.f32.gmra.mxu0 %v285
    %v2123 = vpop.f32.mrf.mxu0
    %v2124 = vadd.f32 %v1963, %v2123
    %2125 = vmatmul.f32.gmra.mxu0 %v291
    %v2126 = vpop.f32.mrf.mxu0
    %v2127 = vadd.f32 %v1966, %v2126
    %2128 = vmatmul.f32.gmra.mxu0 %v297
    %v2129 = vpop.f32.mrf.mxu0
    %v2130 = vadd.f32 %v1969, %v2129
    %2131 = vmatmul.f32.gmra.mxu0 %v303
    %v2132 = vpop.f32.mrf.mxu0
    %v2133 = vadd.f32 %v1972, %v2132
    %2134 = vmatmul.f32.gmra.mxu0 %v309
    %v2135 = vpop.f32.mrf.mxu0
    %v2136 = vadd.f32 %v1975, %v2135
    %2137 = vmatmul.f32.gmra.mxu0 %v315
    %v2138 = vpop.f32.mrf.mxu0
    %v2139 = vadd.f32 %v1978, %v2138
    %2140 = vmatmul.f32.gmra.mxu0 %v321
    %v2141 = vpop.f32.mrf.mxu0
    %v2142 = vadd.f32 %v1981, %v2141
    %2143 = vmatmul.f32.gmra.mxu0 %v327
    %v2144 = vpop.f32.mrf.mxu0
    %v2145 = vadd.f32 %v1984, %v2144
    %2146 = vmatmul.f32.gmra.mxu0 %v333
    %v2147 = vpop.f32.mrf.mxu0
    %v2148 = vadd.f32 %v1987, %v2147
    %2149 = vmatmul.f32.gmra.mxu0 %v339
    %v2150 = vpop.f32.mrf.mxu0
    %v2151 = vadd.f32 %v1990, %v2150
    %2152 = vmatmul.f32.gmra.mxu0 %v345
    %v2153 = vpop.f32.mrf.mxu0
    %v2154 = vadd.f32 %v1993, %v2153
    %2155 = vdwg.mxu0
    %2156 = vmatpush.msra.mxu0 %v507
    %2157 = vmatpush.msra.mxu0 %v505
    %2158 = vmatpush.msra.mxu0 %v503
    %2159 = vmatpush.msra.mxu0 %v501
    %2160 = vmatpush.msra.mxu0 %v499
    %2161 = vmatpush.msra.mxu0 %v497
    %2162 = vmatpush.msra.mxu0 %v495
    %2163 = vmatpush.msra.mxu0 %v493
    %2164 = vmatpush.msra.mxu0 %v491
    %2165 = vmatpush.msra.mxu0 %v489
    %2166 = vmatpush.msra.mxu0 %v487
    %2167 = vmatpush.msra.mxu0 %v485
    %2168 = vmatpush.msra.mxu0 %v483
    %2169 = vmatpush.msra.mxu0 %v481
    %2170 = vmatpush.msra.mxu0 %v479
    %2171 = vmatpush.msra.mxu0 %v477
    %2172 = vmatmul.f32.gmra.mxu0 %v64
    %v2173 = vpop.f32.mrf.mxu0
    %v2174 = vadd.f32 %v2013, %v2173
    %2175 = vmatmul.f32.gmra.mxu0 %v70
    %v2176 = vpop.f32.mrf.mxu0
    %v2177 = vadd.f32 %v2016, %v2176
    %2178 = vmatmul.f32.gmra.mxu0 %v76
    %v2179 = vpop.f32.mrf.mxu0
    %v2180 = vadd.f32 %v2019, %v2179
    %2181 = vmatmul.f32.gmra.mxu0 %v82
    %v2182 = vpop.f32.mrf.mxu0
    %v2183 = vadd.f32 %v2022, %v2182
    %2184 = vmatmul.f32.gmra.mxu0 %v88
    %v2185 = vpop.f32.mrf.mxu0
    %v2186 = vadd.f32 %v2025, %v2185
    %2187 = vmatmul.f32.gmra.mxu0 %v94
    %v2188 = vpop.f32.mrf.mxu0
    %v2189 = vadd.f32 %v2028, %v2188
    %2190 = vmatmul.f32.gmra.mxu0 %v100
    %v2191 = vpop.f32.mrf.mxu0
    %v2192 = vadd.f32 %v2031, %v2191
    %2193 = vmatmul.f32.gmra.mxu0 %v106
    %v2194 = vpop.f32.mrf.mxu0
    %v2195 = vadd.f32 %v2034, %v2194
    %2196 = vmatmul.f32.gmra.mxu0 %v112
    %v2197 = vpop.f32.mrf.mxu0
    %v2198 = vadd.f32 %v2037, %v2197
    %2199 = vmatmul.f32.gmra.mxu0 %v118
    %v2200 = vpop.f32.mrf.mxu0
    %v2201 = vadd.f32 %v2040, %v2200
    %2202 = vmatmul.f32.gmra.mxu0 %v124
    %v2203 = vpop.f32.mrf.mxu0
    %v2204 = vadd.f32 %v2043, %v2203
    %2205 = vmatmul.f32.gmra.mxu0 %v130
    %v2206 = vpop.f32.mrf.mxu0
    %v2207 = vadd.f32 %v2046, %v2206
    %2208 = vmatmul.f32.gmra.mxu0 %v136
    %v2209 = vpop.f32.mrf.mxu0
    %v2210 = vadd.f32 %v2049, %v2209
    %2211 = vmatmul.f32.gmra.mxu0 %v142
    %v2212 = vpop.f32.mrf.mxu0
    %v2213 = vadd.f32 %v2052, %v2212
    %2214 = vmatmul.f32.gmra.mxu0 %v148
    %v2215 = vpop.f32.mrf.mxu0
    %v2216 = vadd.f32 %v2055, %v2215
    %2217 = vmatmul.f32.gmra.mxu0 %v154
    %v2218 = vpop.f32.mrf.mxu0
    %v2219 = vadd.f32 %v2058, %v2218
    %2220 = vmatmul.f32.gmra.mxu0 %v160
    %v2221 = vpop.f32.mrf.mxu0
    %v2222 = vadd.f32 %v2061, %v2221
    %2223 = vmatmul.f32.gmra.mxu0 %v166
    %v2224 = vpop.f32.mrf.mxu0
    %v2225 = vadd.f32 %v2064, %v2224
    %2226 = vmatmul.f32.gmra.mxu0 %v172
    %v2227 = vpop.f32.mrf.mxu0
    %v2228 = vadd.f32 %v2067, %v2227
    %2229 = vmatmul.f32.gmra.mxu0 %v178
    %v2230 = vpop.f32.mrf.mxu0
    %v2231 = vadd.f32 %v2070, %v2230
    %2232 = vmatmul.f32.gmra.mxu0 %v184
    %v2233 = vpop.f32.mrf.mxu0
    %v2234 = vadd.f32 %v2073, %v2233
    %2235 = vmatmul.f32.gmra.mxu0 %v190
    %v2236 = vpop.f32.mrf.mxu0
    %v2237 = vadd.f32 %v2076, %v2236
    %2238 = vmatmul.f32.gmra.mxu0 %v196
    %v2239 = vpop.f32.mrf.mxu0
    %v2240 = vadd.f32 %v2079, %v2239
    %2241 = vmatmul.f32.gmra.mxu0 %v202
    %v2242 = vpop.f32.mrf.mxu0
    %v2243 = vadd.f32 %v2082, %v2242
    %2244 = vmatmul.f32.gmra.mxu0 %v208
    %v2245 = vpop.f32.mrf.mxu0
    %v2246 = vadd.f32 %v2085, %v2245
    %2247 = vmatmul.f32.gmra.mxu0 %v214
    %v2248 = vpop.f32.mrf.mxu0
    %v2249 = vadd.f32 %v2088, %v2248
    %2250 = vmatmul.f32.gmra.mxu0 %v220
    %v2251 = vpop.f32.mrf.mxu0
    %v2252 = vadd.f32 %v2091, %v2251
    %2253 = vmatmul.f32.gmra.mxu0 %v226
    %v2254 = vpop.f32.mrf.mxu0
    %v2255 = vadd.f32 %v2094, %v2254
    %2256 = vmatmul.f32.gmra.mxu0 %v232
    %v2257 = vpop.f32.mrf.mxu0
    %v2258 = vadd.f32 %v2097, %v2257
    %2259 = vmatmul.f32.gmra.mxu0 %v238
    %v2260 = vpop.f32.mrf.mxu0
    %v2261 = vadd.f32 %v2100, %v2260
    %2262 = vmatmul.f32.gmra.mxu0 %v244
    %v2263 = vpop.f32.mrf.mxu0
    %v2264 = vadd.f32 %v2103, %v2263
    %2265 = vmatmul.f32.gmra.mxu0 %v250
    %v2266 = vpop.f32.mrf.mxu0
    %v2267 = vadd.f32 %v2106, %v2266
    %2268 = vmatmul.f32.gmra.mxu0 %v256
    %v2269 = vpop.f32.mrf.mxu0
    %v2270 = vadd.f32 %v2109, %v2269
    %2271 = vmatmul.f32.gmra.mxu0 %v262
    %v2272 = vpop.f32.mrf.mxu0
    %v2273 = vadd.f32 %v2112, %v2272
    %2274 = vmatmul.f32.gmra.mxu0 %v268
    %v2275 = vpop.f32.mrf.mxu0
    %v2276 = vadd.f32 %v2115, %v2275
    %2277 = vmatmul.f32.gmra.mxu0 %v274
    %v2278 = vpop.f32.mrf.mxu0
    %v2279 = vadd.f32 %v2118, %v2278
    %2280 = vmatmul.f32.gmra.mxu0 %v280
    %v2281 = vpop.f32.mrf.mxu0
    %v2282 = vadd.f32 %v2121, %v2281
    %2283 = vmatmul.f32.gmra.mxu0 %v286
    %v2284 = vpop.f32.mrf.mxu0
    %v2285 = vadd.f32 %v2124, %v2284
    %2286 = vmatmul.f32.gmra.mxu0 %v292
    %v2287 = vpop.f32.mrf.mxu0
    %v2288 = vadd.f32 %v2127, %v2287
    %2289 = vmatmul.f32.gmra.mxu0 %v298
    %v2290 = vpop.f32.mrf.mxu0
    %v2291 = vadd.f32 %v2130, %v2290
    %2292 = vmatmul.f32.gmra.mxu0 %v304
    %v2293 = vpop.f32.mrf.mxu0
    %v2294 = vadd.f32 %v2133, %v2293
    %2295 = vmatmul.f32.gmra.mxu0 %v310
    %v2296 = vpop.f32.mrf.mxu0
    %v2297 = vadd.f32 %v2136, %v2296
    %2298 = vmatmul.f32.gmra.mxu0 %v316
    %v2299 = vpop.f32.mrf.mxu0
    %v2300 = vadd.f32 %v2139, %v2299
    %2301 = vmatmul.f32.gmra.mxu0 %v322
    %v2302 = vpop.f32.mrf.mxu0
    %v2303 = vadd.f32 %v2142, %v2302
    %2304 = vmatmul.f32.gmra.mxu0 %v328
    %v2305 = vpop.f32.mrf.mxu0
    %v2306 = vadd.f32 %v2145, %v2305
    %2307 = vmatmul.f32.gmra.mxu0 %v334
    %v2308 = vpop.f32.mrf.mxu0
    %v2309 = vadd.f32 %v2148, %v2308
    %2310 = vmatmul.f32.gmra.mxu0 %v340
    %v2311 = vpop.f32.mrf.mxu0
    %v2312 = vadd.f32 %v2151, %v2311
    %2313 = vmatmul.f32.gmra.mxu0 %v346
    %v2314 = vpop.f32.mrf.mxu0
    %v2315 = vadd.f32 %v2154, %v2314
    %2316 = vdwg.mxu0
    %2317 = vmatpush.msra.mxu0 %v539
    %2318 = vmatpush.msra.mxu0 %v537
    %2319 = vmatpush.msra.mxu0 %v535
    %2320 = vmatpush.msra.mxu0 %v533
    %2321 = vmatpush.msra.mxu0 %v531
    %2322 = vmatpush.msra.mxu0 %v529
    %2323 = vmatpush.msra.mxu0 %v527
    %2324 = vmatpush.msra.mxu0 %v525
    %2325 = vmatpush.msra.mxu0 %v523
    %2326 = vmatpush.msra.mxu0 %v521
    %2327 = vmatpush.msra.mxu0 %v519
    %2328 = vmatpush.msra.mxu0 %v517
    %2329 = vmatpush.msra.mxu0 %v515
    %2330 = vmatpush.msra.mxu0 %v513
    %2331 = vmatpush.msra.mxu0 %v511
    %2332 = vmatpush.msra.mxu0 %v509
    %2333 = vmatmul.f32.gmra.mxu0 %v65
    %v2334 = vpop.f32.mrf.mxu0
    %v2335 = vadd.f32 %v2174, %v2334
    %2336 = vmatmul.f32.gmra.mxu0 %v71
    %v2337 = vpop.f32.mrf.mxu0
    %v2338 = vadd.f32 %v2177, %v2337
    %2339 = vmatmul.f32.gmra.mxu0 %v77
    %v2340 = vpop.f32.mrf.mxu0
    %v2341 = vadd.f32 %v2180, %v2340
    %2342 = vmatmul.f32.gmra.mxu0 %v83
    %v2343 = vpop.f32.mrf.mxu0
    %v2344 = vadd.f32 %v2183, %v2343
    %2345 = vmatmul.f32.gmra.mxu0 %v89
    %v2346 = vpop.f32.mrf.mxu0
    %v2347 = vadd.f32 %v2186, %v2346
    %2348 = vmatmul.f32.gmra.mxu0 %v95
    %v2349 = vpop.f32.mrf.mxu0
    %v2350 = vadd.f32 %v2189, %v2349
    %2351 = vmatmul.f32.gmra.mxu0 %v101
    %v2352 = vpop.f32.mrf.mxu0
    %v2353 = vadd.f32 %v2192, %v2352
    %2354 = vmatmul.f32.gmra.mxu0 %v107
    %v2355 = vpop.f32.mrf.mxu0
    %v2356 = vadd.f32 %v2195, %v2355
    %2357 = vmatmul.f32.gmra.mxu0 %v113
    %v2358 = vpop.f32.mrf.mxu0
    %v2359 = vadd.f32 %v2198, %v2358
    %2360 = vmatmul.f32.gmra.mxu0 %v119
    %v2361 = vpop.f32.mrf.mxu0
    %v2362 = vadd.f32 %v2201, %v2361
    %2363 = vmatmul.f32.gmra.mxu0 %v125
    %v2364 = vpop.f32.mrf.mxu0
    %v2365 = vadd.f32 %v2204, %v2364
    %2366 = vmatmul.f32.gmra.mxu0 %v131
    %v2367 = vpop.f32.mrf.mxu0
    %v2368 = vadd.f32 %v2207, %v2367
    %2369 = vmatmul.f32.gmra.mxu0 %v137
    %v2370 = vpop.f32.mrf.mxu0
    %v2371 = vadd.f32 %v2210, %v2370
    %2372 = vmatmul.f32.gmra.mxu0 %v143
    %v2373 = vpop.f32.mrf.mxu0
    %v2374 = vadd.f32 %v2213, %v2373
    %2375 = vmatmul.f32.gmra.mxu0 %v149
    %v2376 = vpop.f32.mrf.mxu0
    %v2377 = vadd.f32 %v2216, %v2376
    %2378 = vmatmul.f32.gmra.mxu0 %v155
    %v2379 = vpop.f32.mrf.mxu0
    %v2380 = vadd.f32 %v2219, %v2379
    %2381 = vmatmul.f32.gmra.mxu0 %v161
    %v2382 = vpop.f32.mrf.mxu0
    %v2383 = vadd.f32 %v2222, %v2382
    %2384 = vmatmul.f32.gmra.mxu0 %v167
    %v2385 = vpop.f32.mrf.mxu0
    %v2386 = vadd.f32 %v2225, %v2385
    %2387 = vmatmul.f32.gmra.mxu0 %v173
    %v2388 = vpop.f32.mrf.mxu0
    %v2389 = vadd.f32 %v2228, %v2388
    %2390 = vmatmul.f32.gmra.mxu0 %v179
    %v2391 = vpop.f32.mrf.mxu0
    %v2392 = vadd.f32 %v2231, %v2391
    %2393 = vmatmul.f32.gmra.mxu0 %v185
    %v2394 = vpop.f32.mrf.mxu0
    %v2395 = vadd.f32 %v2234, %v2394
    %2396 = vmatmul.f32.gmra.mxu0 %v191
    %v2397 = vpop.f32.mrf.mxu0
    %v2398 = vadd.f32 %v2237, %v2397
    %2399 = vmatmul.f32.gmra.mxu0 %v197
    %v2400 = vpop.f32.mrf.mxu0
    %v2401 = vadd.f32 %v2240, %v2400
    %2402 = vmatmul.f32.gmra.mxu0 %v203
    %v2403 = vpop.f32.mrf.mxu0
    %v2404 = vadd.f32 %v2243, %v2403
    %2405 = vmatmul.f32.gmra.mxu0 %v209
    %v2406 = vpop.f32.mrf.mxu0
    %v2407 = vadd.f32 %v2246, %v2406
    %2408 = vmatmul.f32.gmra.mxu0 %v215
    %v2409 = vpop.f32.mrf.mxu0
    %v2410 = vadd.f32 %v2249, %v2409
    %2411 = vmatmul.f32.gmra.mxu0 %v221
    %v2412 = vpop.f32.mrf.mxu0
    %v2413 = vadd.f32 %v2252, %v2412
    %2414 = vmatmul.f32.gmra.mxu0 %v227
    %v2415 = vpop.f32.mrf.mxu0
    %v2416 = vadd.f32 %v2255, %v2415
    %2417 = vmatmul.f32.gmra.mxu0 %v233
    %v2418 = vpop.f32.mrf.mxu0
    %v2419 = vadd.f32 %v2258, %v2418
    %2420 = vmatmul.f32.gmra.mxu0 %v239
    %v2421 = vpop.f32.mrf.mxu0
    %v2422 = vadd.f32 %v2261, %v2421
    %2423 = vmatmul.f32.gmra.mxu0 %v245
    %v2424 = vpop.f32.mrf.mxu0
    %v2425 = vadd.f32 %v2264, %v2424
    %2426 = vmatmul.f32.gmra.mxu0 %v251
    %v2427 = vpop.f32.mrf.mxu0
    %v2428 = vadd.f32 %v2267, %v2427
    %2429 = vmatmul.f32.gmra.mxu0 %v257
    %v2430 = vpop.f32.mrf.mxu0
    %v2431 = vadd.f32 %v2270, %v2430
    %2432 = vmatmul.f32.gmra.mxu0 %v263
    %v2433 = vpop.f32.mrf.mxu0
    %v2434 = vadd.f32 %v2273, %v2433
    %2435 = vmatmul.f32.gmra.mxu0 %v269
    %v2436 = vpop.f32.mrf.mxu0
    %v2437 = vadd.f32 %v2276, %v2436
    %2438 = vmatmul.f32.gmra.mxu0 %v275
    %v2439 = vpop.f32.mrf.mxu0
    %v2440 = vadd.f32 %v2279, %v2439
    %2441 = vmatmul.f32.gmra.mxu0 %v281
    %v2442 = vpop.f32.mrf.mxu0
    %v2443 = vadd.f32 %v2282, %v2442
    %2444 = vmatmul.f32.gmra.mxu0 %v287
    %v2445 = vpop.f32.mrf.mxu0
    %v2446 = vadd.f32 %v2285, %v2445
    %2447 = vmatmul.f32.gmra.mxu0 %v293
    %v2448 = vpop.f32.mrf.mxu0
    %v2449 = vadd.f32 %v2288, %v2448
    %2450 = vmatmul.f32.gmra.mxu0 %v299
    %v2451 = vpop.f32.mrf.mxu0
    %v2452 = vadd.f32 %v2291, %v2451
    %2453 = vmatmul.f32.gmra.mxu0 %v305
    %v2454 = vpop.f32.mrf.mxu0
    %v2455 = vadd.f32 %v2294, %v2454
    %2456 = vmatmul.f32.gmra.mxu0 %v311
    %v2457 = vpop.f32.mrf.mxu0
    %v2458 = vadd.f32 %v2297, %v2457
    %2459 = vmatmul.f32.gmra.mxu0 %v317
    %v2460 = vpop.f32.mrf.mxu0
    %v2461 = vadd.f32 %v2300, %v2460
    %2462 = vmatmul.f32.gmra.mxu0 %v323
    %v2463 = vpop.f32.mrf.mxu0
    %v2464 = vadd.f32 %v2303, %v2463
    %2465 = vmatmul.f32.gmra.mxu0 %v329
    %v2466 = vpop.f32.mrf.mxu0
    %v2467 = vadd.f32 %v2306, %v2466
    %2468 = vmatmul.f32.gmra.mxu0 %v335
    %v2469 = vpop.f32.mrf.mxu0
    %v2470 = vadd.f32 %v2309, %v2469
    %2471 = vmatmul.f32.gmra.mxu0 %v341
    %v2472 = vpop.f32.mrf.mxu0
    %v2473 = vadd.f32 %v2312, %v2472
    %2474 = vmatmul.f32.gmra.mxu0 %v347
    %v2475 = vpop.f32.mrf.mxu0
    %v2476 = vadd.f32 %v2315, %v2475
    %2477 = vdwg.mxu0
    %2478 = vst [vmem:[#allocation8] sm:$0xff] %v1369
    %2479 = vst [vmem:[#allocation8 + $0x8] sm:$0xff] %v2335
    %2480 = vst [vmem:[#allocation8 + $0x10] sm:$0xff] %v1372
    %2481 = vst [vmem:[#allocation8 + $0x18] sm:$0xff] %v2338
    %2482 = vst [vmem:[#allocation8 + $0x20] sm:$0xff] %v1375
    %2483 = vst [vmem:[#allocation8 + $0x28] sm:$0xff] %v2341
    %2484 = vst [vmem:[#allocation8 + $0x30] sm:$0xff] %v1378
    %2485 = vst [vmem:[#allocation8 + $0x38] sm:$0xff] %v2344
    %2486 = vst [vmem:[#allocation8 + $0x40] sm:$0xff] %v1381
    %2487 = vst [vmem:[#allocation8 + $0x48] sm:$0xff] %v2347
    %2488 = vst [vmem:[#allocation8 + $0x50] sm:$0xff] %v1384
    %2489 = vst [vmem:[#allocation8 + $0x58] sm:$0xff] %v2350
    %2490 = vst [vmem:[#allocation8 + $0x60] sm:$0xff] %v1387
    %2491 = vst [vmem:[#allocation8 + $0x68] sm:$0xff] %v2353
    %2492 = vst [vmem:[#allocation8 + $0x70] sm:$0xff] %v1390
    %2493 = vst [vmem:[#allocation8 + $0x78] sm:$0xff] %v2356
    %2494 = vst [vmem:[#allocation8 + $0x80] sm:$0xff] %v1393
    %2495 = vst [vmem:[#allocation8 + $0x88] sm:$0xff] %v2359
    %2496 = vst [vmem:[#allocation8 + $0x90] sm:$0xff] %v1396
    %2497 = vst [vmem:[#allocation8 + $0x98] sm:$0xff] %v2362
    %2498 = vst [vmem:[#allocation8 + $0xa0] sm:$0xff] %v1399
    %2499 = vst [vmem:[#allocation8 + $0xa8] sm:$0xff] %v2365
    %2500 = vst [vmem:[#allocation8 + $0xb0] sm:$0xff] %v1402
    %2501 = vst [vmem:[#allocation8 + $0xb8] sm:$0xff] %v2368
    %2502 = vst [vmem:[#allocation8 + $0xc0] sm:$0xff] %v1405
    %2503 = vst [vmem:[#allocation8 + $0xc8] sm:$0xff] %v2371
    %2504 = vst [vmem:[#allocation8 + $0xd0] sm:$0xff] %v1408
    %2505 = vst [vmem:[#allocation8 + $0xd8] sm:$0xff] %v2374
    %2506 = vst [vmem:[#allocation8 + $0xe0] sm:$0xff] %v1411
    %2507 = vst [vmem:[#allocation8 + $0xe8] sm:$0xff] %v2377
    %2508 = vst [vmem:[#allocation8 + $0xf0] sm:$0xff] %v1414
    %2509 = vst [vmem:[#allocation8 + $0xf8] sm:$0xff] %v2380
    %2510 = vst [vmem:[#allocation8 + $0x100] sm:$0xff] %v1417
    %2511 = vst [vmem:[#allocation8 + $0x108] sm:$0xff] %v2383
    %2512 = vst [vmem:[#allocation8 + $0x110] sm:$0xff] %v1420
    %2513 = vst [vmem:[#allocation8 + $0x118] sm:$0xff] %v2386
    %2514 = vst [vmem:[#allocation8 + $0x120] sm:$0xff] %v1423
    %2515 = vst [vmem:[#allocation8 + $0x128] sm:$0xff] %v2389
    %2516 = vst [vmem:[#allocation8 + $0x130] sm:$0xff] %v1426
    %2517 = vst [vmem:[#allocation8 + $0x138] sm:$0xff] %v2392
    %2518 = vst [vmem:[#allocation8 + $0x140] sm:$0xff] %v1429
    %2519 = vst [vmem:[#allocation8 + $0x148] sm:$0xff] %v2395
    %2520 = vst [vmem:[#allocation8 + $0x150] sm:$0xff] %v1432
    %2521 = vst [vmem:[#allocation8 + $0x158] sm:$0xff] %v2398
    %2522 = vst [vmem:[#allocation8 + $0x160] sm:$0xff] %v1435
    %2523 = vst [vmem:[#allocation8 + $0x168] sm:$0xff] %v2401
    %2524 = vst [vmem:[#allocation8 + $0x170] sm:$0xff] %v1438
    %2525 = vst [vmem:[#allocation8 + $0x178] sm:$0xff] %v2404
    %2526 = vst [vmem:[#allocation8 + $0x180] sm:$0xff] %v1441
    %2527 = vst [vmem:[#allocation8 + $0x188] sm:$0xff] %v2407
    %2528 = vst [vmem:[#allocation8 + $0x190] sm:$0xff] %v1444
    %2529 = vst [vmem:[#allocation8 + $0x198] sm:$0xff] %v2410
    %2530 = vst [vmem:[#allocation8 + $0x1a0] sm:$0xff] %v1447
    %2531 = vst [vmem:[#allocation8 + $0x1a8] sm:$0xff] %v2413
    %2532 = vst [vmem:[#allocation8 + $0x1b0] sm:$0xff] %v1450
    %2533 = vst [vmem:[#allocation8 + $0x1b8] sm:$0xff] %v2416
    %2534 = vst [vmem:[#allocation8 + $0x1c0] sm:$0xff] %v1453
    %2535 = vst [vmem:[#allocation8 + $0x1c8] sm:$0xff] %v2419
    %2536 = vst [vmem:[#allocation8 + $0x1d0] sm:$0xff] %v1456
    %2537 = vst [vmem:[#allocation8 + $0x1d8] sm:$0xff] %v2422
    %2538 = vst [vmem:[#allocation8 + $0x1e0] sm:$0xff] %v1459
    %2539 = vst [vmem:[#allocation8 + $0x1e8] sm:$0xff] %v2425
    %2540 = vst [vmem:[#allocation8 + $0x1f0] sm:$0xff] %v1462
    %2541 = vst [vmem:[#allocation8 + $0x1f8] sm:$0xff] %v2428
    %2542 = vst [vmem:[#allocation8 + $0x200] sm:$0xff] %v1465
    %2543 = vst [vmem:[#allocation8 + $0x208] sm:$0xff] %v2431
    %2544 = vst [vmem:[#allocation8 + $0x210] sm:$0xff] %v1468
    %2545 = vst [vmem:[#allocation8 + $0x218] sm:$0xff] %v2434
    %2546 = vst [vmem:[#allocation8 + $0x220] sm:$0xff] %v1471
    %2547 = vst [vmem:[#allocation8 + $0x228] sm:$0xff] %v2437
    %2548 = vst [vmem:[#allocation8 + $0x230] sm:$0xff] %v1474
    %2549 = vst [vmem:[#allocation8 + $0x238] sm:$0xff] %v2440
    %2550 = vst [vmem:[#allocation8 + $0x240] sm:$0xff] %v1477
    %2551 = vst [vmem:[#allocation8 + $0x248] sm:$0xff] %v2443
    %2552 = vst [vmem:[#allocation8 + $0x250] sm:$0xff] %v1480
    %2553 = vst [vmem:[#allocation8 + $0x258] sm:$0xff] %v2446
    %2554 = vst [vmem:[#allocation8 + $0x260] sm:$0xff] %v1483
    %2555 = vst [vmem:[#allocation8 + $0x268] sm:$0xff] %v2449
    %2556 = vst [vmem:[#allocation8 + $0x270] sm:$0xff] %v1486
    %2557 = vst [vmem:[#allocation8 + $0x278] sm:$0xff] %v2452
    %2558 = vst [vmem:[#allocation8 + $0x280] sm:$0xff] %v1489
    %2559 = vst [vmem:[#allocation8 + $0x288] sm:$0xff] %v2455
    %2560 = vst [vmem:[#allocation8 + $0x290] sm:$0xff] %v1492
    %2561 = vst [vmem:[#allocation8 + $0x298] sm:$0xff] %v2458
    %2562 = vst [vmem:[#allocation8 + $0x2a0] sm:$0xff] %v1495
    %2563 = vst [vmem:[#allocation8 + $0x2a8] sm:$0xff] %v2461
    %2564 = vst [vmem:[#allocation8 + $0x2b0] sm:$0xff] %v1498
    %2565 = vst [vmem:[#allocation8 + $0x2b8] sm:$0xff] %v2464
    %2566 = vst [vmem:[#allocation8 + $0x2c0] sm:$0xff] %v1501
    %2567 = vst [vmem:[#allocation8 + $0x2c8] sm:$0xff] %v2467
    %2568 = vst [vmem:[#allocation8 + $0x2d0] sm:$0xff] %v1504
    %2569 = vst [vmem:[#allocation8 + $0x2d8] sm:$0xff] %v2470
    %2570 = vst [vmem:[#allocation8 + $0x2e0] sm:$0xff] %v1507
    %2571 = vst [vmem:[#allocation8 + $0x2e8] sm:$0xff] %v2473
    %2572 = vst [vmem:[#allocation8 + $0x2f0] sm:$0xff] %v1510
    %2573 = vst [vmem:[#allocation8 + $0x2f8] sm:$0xff] %v2476
    // Predicated region
    $region26: #{tpu_custom_call.1} parent=1 // pred_check
      _
    $region27: #{tpu_custom_call.1} parent=1 // pred_check_branch
      %2575 = sbr.rel (0) target = $region29
    $region28: #{tpu_custom_call.1} parent=1 // pred_region
      %2577 = vsyncadd [#allocation4], 0
      %s2578 = sshll.u32 [#allocation8], 4
      %s2579 = int_to_ptr.vmem [resolvable:$true] %s2578
      %s2580 = sshll.u32 %s3, 4
      %s2581 = int_to_ptr.hbm [resolvable:$true] %s2580
      %2586 = dma.vmem_to_hbm [thread:$0]  %s2579, 12288, %s2581, [#allocation4], 256, 256, 16
    $region29: #{tpu_custom_call.1} parent=1 // pred_fallthru
      _
    // Predicated region
    $region30: #{tpu_custom_call.1} parent=1 // pred_check
      _
    $region31: #{tpu_custom_call.1} parent=1 // pred_check_branch
      %2588 = sbr.rel (0) target = $region33
    $region32: #{tpu_custom_call.1} parent=1 // pred_region
      %2590 = dma.done [#allocation4], 12288
    $region33: #{tpu_custom_call.1} parent=1 // pred_fallthru
      _
    %2591 = vsyncpa [#allocation3], 1
    %2592 = vsyncpa [#allocation6], 1
    %2593 = vsyncpa [#allocation4], 1

</llo_original>
